<compile_context>
chip_gen: v7x
topology: tpu7x:2x2x1
jax: 0.10.0
libtpu: 0.0.40
codegen_flags: <defaults>
</compile_context>

<pallas_src>
import functools

import jax
import jax.numpy as jnp
from jax.experimental import pallas as pl
from jax.experimental.pallas import tpu as pltpu

HIDDEN = 64  # nn.Linear(1, 64)


def _pos_mlp_kernel(p_ref, w1_ref, b1_ref, w2_ref, b2_ref, o_ref, *, chunk_n):
    """One lane-tile of positions through the 2-layer MLP (transposed layout).

    p_ref  : (1, TILE_N)        raw position-channel values (the `1-p` is folded into w1/b1)
    w1_ref : (HIDDEN, 1)        -W1            (folded)
    b1_ref : (HIDDEN, 1)        W1 + b1        (folded)
    w2_ref : (F, HIDDEN)        Linear(64, F).weight
    b2_ref : (F, 1)
    o_ref  : (F, TILE_N)        lane-dense output
    """
    tile_n = o_ref.shape[-1]
    n_chunks = tile_n // chunk_n

    w2 = w2_ref[...]                                   # (F, HIDDEN)
    b2 = b2_ref[...]                                   # (F, 1)
    # Hoist the lane-broadcasts of the tiny weight columns out of the chunk loop
    # (JAX does not CSE broadcast_in_dim inside loops).
    w1b = jnp.broadcast_to(w1_ref[...], (HIDDEN, chunk_n))
    b1b = jnp.broadcast_to(b1_ref[...], (HIDDEN, chunk_n))

    # Statically unrolled chunk loop: bounds the (HIDDEN, chunk) intermediate while keeping the
    # grid-step count (and its fixed per-step cost) low. All slices are static -> cheap ref views.
    for c in range(n_chunks):
        lo, hi = c * chunk_n, (c + 1) * chunk_n
        x = p_ref[:, lo:hi]                            # (1, chunk)  sublane-broadcast below
        h = jnp.maximum(w1b * x + b1b, 0.0)            # (HIDDEN, chunk)  VPU
        y = jnp.dot(w2, h, preferred_element_type=jnp.float32) + b2   # (F, chunk)  MXU, lane-dense N
        o_ref[:, lo:hi] = y.astype(o_ref.dtype)


@functools.partial(jax.jit, static_argnames=("pos_channel", "tile_n", "chunk_n"))
def position_encoder_forward(features, positions, w1, b1, w2, b2, *,
                             pos_channel=64, tile_n=32768, chunk_n=4096):
    """features: (1, C, H, W), positions: (1, P, H, W) with P > pos_channel.

    w1: (64, 1), b1: (64,), w2: (F, 64), b2: (F,)   (PyTorch Linear layouts)
    Returns (1, C + F, H, W)  [the original forward implies F == 3].
    """
    f_dim = w2.shape[0]
    _, _, H, W = features.shape
    N = H * W

    # ---- lane-tile sizing (no host-side padding; ragged last block is masked by Pallas) ----
    if tile_n >= N:
        tile_n = N                                   # single block == full array dims (always legal)
    else:
        tile_n = max(128, (tile_n // 128) * 128)     # lane dim must be a multiple of 128
    chunk_n = min(chunk_n, tile_n)
    if tile_n % chunk_n != 0:
        chunk_n = tile_n                             # fall back to one chunk per tile
    n_tiles = pl.cdiv(N, tile_n)

    # Lane-dense input: whole position channel as one (1, N) row (contiguous reshape, no copy cost).
    p_row = positions[0, pos_channel, :, :].reshape(1, N).astype(jnp.float32)

    # Fold `1 - p` into layer 1: relu(w1*(1-p)+b1) == relu((-w1)*p + (w1+b1)).
    w1_col = (-w1.reshape(HIDDEN, 1)).astype(jnp.float32)                    # (64, 1)
    b1_col = (w1.reshape(HIDDEN) + b1).reshape(HIDDEN, 1).astype(jnp.float32)  # (64, 1)
    w2_m = w2.astype(jnp.float32)                                            # (F, 64)
    b2_col = b2.reshape(f_dim, 1).astype(jnp.float32)                        # (F, 1)

    y_fn = pl.pallas_call(
        functools.partial(_pos_mlp_kernel, chunk_n=chunk_n),
        out_shape=jax.ShapeDtypeStruct((f_dim, N), jnp.float32),
        grid=(n_tiles,),
        in_specs=[
            pl.BlockSpec((1, tile_n), lambda i: (0, i)),        # positions row (lane-dense)
            pl.BlockSpec((HIDDEN, 1), lambda i: (0, 0)),        # folded -W1
            pl.BlockSpec((HIDDEN, 1), lambda i: (0, 0)),        # folded W1 + b1
            pl.BlockSpec((f_dim, HIDDEN), lambda i: (0, 0)),    # W2
            pl.BlockSpec((f_dim, 1), lambda i: (0, 0)),         # b2
        ],
        out_specs=pl.BlockSpec((f_dim, tile_n), lambda i: (0, i)),
        compiler_params=pltpu.CompilerParams(
            dimension_semantics=("parallel",)),                 # lets v7x shard the grid across 2 TCs
    )(p_row, w1_col, b1_col, w2_m, b2_col)

    # torch semantics: the row-major (N, F) buffer is .view'ed as (1, F, H, W).
    # Reproduce that exactly: transpose the small lane-dense (F, N) output, then raw reshape.
    pos_enc = y_fn.T.reshape(1, f_dim, H, W)

    # TODO(synk): the channel concat copies `features` once — this copy is inherent to torch.cat
    # semantics; fusing it away would require the caller to donate a preallocated (1, C+F, H, W) buffer.
    return jnp.concatenate([features, pos_enc.astype(features.dtype)], axis=1)


def _reference_forward(features, positions, w1, b1, w2, b2, pos_channel):
    # Pure-JAX transcription of the PyTorch forward, for correctness check only.
    _, _, H, W = features.shape
    p = 1.0 - positions[0, pos_channel, :, :]
    x = p.reshape(-1, 1)
    h = jnp.maximum(x @ w1.T + b1, 0.0)
    y = h @ w2.T + b2
    enc = y.reshape(1, w2.shape[0], H, W)
    return jnp.concatenate([features, enc.astype(features.dtype)], axis=1)


if __name__ == "__main__":
    key = jax.random.PRNGKey(0)
    kf, kp, k1, k2, k3, k4 = jax.random.split(key, 6)

    # Small shapes consistent with the module (original uses H=W=832, pos channel 64, F=3).
    C, H, W = 4, 64, 64
    feature_dim = 3          # implied by .view(1, 3, 832, 832)
    POS_CH = 8               # small-shape stand-in for the hardcoded channel index 64

    features = jax.random.normal(kf, (1, C, H, W), dtype=jnp.float32)
    positions = jax.random.uniform(kp, (1, POS_CH + 1, H, W), dtype=jnp.float32)

    # Deterministic synthetic parameters (shapes from nn.Linear(1,64) and nn.Linear(64,3)).
    w1 = jax.random.normal(k1, (HIDDEN, 1), dtype=jnp.float32) * 0.1
    b1 = jax.random.normal(k2, (HIDDEN,), dtype=jnp.float32) * 0.1
    w2 = jax.random.normal(k3, (feature_dim, HIDDEN), dtype=jnp.float32) * 0.1
    b2 = jax.random.normal(k4, (feature_dim,), dtype=jnp.float32) * 0.1

    # tile_n < N here so the multi-step pipelined grid path (and the inner chunk loop) is exercised.
    out = position_encoder_forward(features, positions, w1, b1, w2, b2,
                                   pos_channel=POS_CH, tile_n=2048, chunk_n=512)
    out = jax.block_until_ready(out)

    ref = _reference_forward(features, positions, w1, b1, w2, b2, POS_CH)
    assert out.shape == (1, C + feature_dim, H, W), out.shape
    assert jnp.allclose(out, ref, atol=1e-5, rtol=1e-5), "mismatch vs reference"

    print("KERNEL_OK")
</pallas_src>

<mosaic_0001>
module attributes {stable_mosaic.version = 11 : i64} {
  func.func @_pos_mlp_kernel(%arg0: i32, %arg1: memref<1x2048xf32, #tpu.memory_space<vmem>>, %arg2: memref<64x1xf32, #tpu.memory_space<vmem>>, %arg3: memref<64x1xf32, #tpu.memory_space<vmem>>, %arg4: memref<3x64xf32, #tpu.memory_space<vmem>>, %arg5: memref<3x1xf32, #tpu.memory_space<vmem>>, %arg6: memref<3x2048xf32, #tpu.memory_space<vmem>>) attributes {dimension_semantics = [#tpu.dimension_semantics<parallel>], iteration_bounds = array<i64: 2>, scalar_prefetch = 0 : i64, scratch_operands = 0 : i64, tpu.core_type = #tpu.core_type<tc>, window_params = [{transform_indices = @transform_0, window_bounds = array<i64: 1, 2048>}, {pipeline_mode = #tpu.pipeline_mode<synchronous>, transform_indices = @transform_1, window_bounds = array<i64: 64, 1>}, {pipeline_mode = #tpu.pipeline_mode<synchronous>, transform_indices = @transform_2, window_bounds = array<i64: 64, 1>}, {pipeline_mode = #tpu.pipeline_mode<synchronous>, transform_indices = @transform_3, window_bounds = array<i64: 3, 64>}, {pipeline_mode = #tpu.pipeline_mode<synchronous>, transform_indices = @transform_4, window_bounds = array<i64: 3, 1>}, {transform_indices = @transform_5, window_bounds = array<i64: 3, 2048>}]} {
    %c0 = arith.constant 0 : index
    %c0_0 = arith.constant 0 : index
    %0 = vector.load %arg4[%c0, %c0_0] : memref<3x64xf32, #tpu.memory_space<vmem>>, vector<3x64xf32>
    %c0_1 = arith.constant 0 : index
    %c0_2 = arith.constant 0 : index
    %1 = vector.load %arg5[%c0_1, %c0_2] : memref<3x1xf32, #tpu.memory_space<vmem>>, vector<3x1xf32>
    %c0_3 = arith.constant 0 : index
    %c0_4 = arith.constant 0 : index
    %2 = vector.load %arg2[%c0_3, %c0_4] : memref<64x1xf32, #tpu.memory_space<vmem>>, vector<64x1xf32>
    %3 = vector.shape_cast %2 : vector<64x1xf32> to vector<64x1xf32>
    %4 = vector.broadcast %3 : vector<64x1xf32> to vector<64x512xf32>
    %c0_5 = arith.constant 0 : index
    %c0_6 = arith.constant 0 : index
    %5 = vector.load %arg3[%c0_5, %c0_6] : memref<64x1xf32, #tpu.memory_space<vmem>>, vector<64x1xf32>
    %6 = vector.shape_cast %5 : vector<64x1xf32> to vector<64x1xf32>
    %7 = vector.broadcast %6 : vector<64x1xf32> to vector<64x512xf32>
    %c0_7 = arith.constant 0 : index
    %c0_8 = arith.constant 0 : index
    %8 = vector.load %arg1[%c0_7, %c0_8] : memref<1x2048xf32, #tpu.memory_space<vmem>>, vector<1x512xf32>
    %9 = vector.broadcast %8 : vector<1x512xf32> to vector<64x512xf32>
    %10 = arith.mulf %4, %9 : vector<64x512xf32>
    %11 = arith.addf %10, %7 : vector<64x512xf32>
    %cst = arith.constant 0.000000e+00 : f32
    %12 = vector.broadcast %cst : f32 to vector<64x512xf32>
    %13 = arith.maximumf %11, %12 : vector<64x512xf32>
    %cst_9 = arith.constant dense<0.000000e+00> : vector<3x512xf32>
    %14 = tpu.matmul %0, %13, %cst_9 {dimension_numbers = #tpu.dot_dimension_numbers<[1], [0], [0], [1], [0, 0, 1, 1], [], []>} : vector<3x64xf32>, vector<64x512xf32>, vector<3x512xf32> -> vector<3x512xf32>
    %15 = vector.broadcast %1 : vector<3x1xf32> to vector<3x512xf32>
    %16 = arith.addf %14, %15 : vector<3x512xf32>
    %c0_10 = arith.constant 0 : index
    %c0_11 = arith.constant 0 : index
    %17 = vector.load %arg6[%c0_10, %c0_11] : memref<3x2048xf32, #tpu.memory_space<vmem>>, vector<3x512xf32>
    tpu.vector_store %arg6[%c0_10, %c0_11], %16 {strides = array<i32>} : memref<3x2048xf32, #tpu.memory_space<vmem>>, vector<3x512xf32>,
    %c0_12 = arith.constant 0 : index
    %c512 = arith.constant 512 : index
    %18 = vector.load %arg1[%c0_12, %c512] : memref<1x2048xf32, #tpu.memory_space<vmem>>, vector<1x512xf32>
    %19 = vector.broadcast %18 : vector<1x512xf32> to vector<64x512xf32>
    %20 = arith.mulf %4, %19 : vector<64x512xf32>
    %21 = arith.addf %20, %7 : vector<64x512xf32>
    %cst_13 = arith.constant 0.000000e+00 : f32
    %22 = vector.broadcast %cst_13 : f32 to vector<64x512xf32>
    %23 = arith.maximumf %21, %22 : vector<64x512xf32>
    %cst_14 = arith.constant dense<0.000000e+00> : vector<3x512xf32>
    %24 = tpu.matmul %0, %23, %cst_14 {dimension_numbers = #tpu.dot_dimension_numbers<[1], [0], [0], [1], [0, 0, 1, 1], [], []>} : vector<3x64xf32>, vector<64x512xf32>, vector<3x512xf32> -> vector<3x512xf32>
    %25 = vector.broadcast %1 : vector<3x1xf32> to vector<3x512xf32>
    %26 = arith.addf %24, %25 : vector<3x512xf32>
    %c0_15 = arith.constant 0 : index
    %c512_16 = arith.constant 512 : index
    %27 = vector.load %arg6[%c0_15, %c512_16] : memref<3x2048xf32, #tpu.memory_space<vmem>>, vector<3x512xf32>
    tpu.vector_store %arg6[%c0_15, %c512_16], %26 {strides = array<i32>} : memref<3x2048xf32, #tpu.memory_space<vmem>>, vector<3x512xf32>,
    %c0_17 = arith.constant 0 : index
    %c1024 = arith.constant 1024 : index
    %28 = vector.load %arg1[%c0_17, %c1024] : memref<1x2048xf32, #tpu.memory_space<vmem>>, vector<1x512xf32>
    %29 = vector.broadcast %28 : vector<1x512xf32> to vector<64x512xf32>
    %30 = arith.mulf %4, %29 : vector<64x512xf32>
    %31 = arith.addf %30, %7 : vector<64x512xf32>
    %cst_18 = arith.constant 0.000000e+00 : f32
    %32 = vector.broadcast %cst_18 : f32 to vector<64x512xf32>
    %33 = arith.maximumf %31, %32 : vector<64x512xf32>
    %cst_19 = arith.constant dense<0.000000e+00> : vector<3x512xf32>
    %34 = tpu.matmul %0, %33, %cst_19 {dimension_numbers = #tpu.dot_dimension_numbers<[1], [0], [0], [1], [0, 0, 1, 1], [], []>} : vector<3x64xf32>, vector<64x512xf32>, vector<3x512xf32> -> vector<3x512xf32>
    %35 = vector.broadcast %1 : vector<3x1xf32> to vector<3x512xf32>
    %36 = arith.addf %34, %35 : vector<3x512xf32>
    %c0_20 = arith.constant 0 : index
    %c1024_21 = arith.constant 1024 : index
    %37 = vector.load %arg6[%c0_20, %c1024_21] : memref<3x2048xf32, #tpu.memory_space<vmem>>, vector<3x512xf32>
    tpu.vector_store %arg6[%c0_20, %c1024_21], %36 {strides = array<i32>} : memref<3x2048xf32, #tpu.memory_space<vmem>>, vector<3x512xf32>,
    %c0_22 = arith.constant 0 : index
    %c1536 = arith.constant 1536 : index
    %38 = vector.load %arg1[%c0_22, %c1536] : memref<1x2048xf32, #tpu.memory_space<vmem>>, vector<1x512xf32>
    %39 = vector.broadcast %38 : vector<1x512xf32> to vector<64x512xf32>
    %40 = arith.mulf %4, %39 : vector<64x512xf32>
    %41 = arith.addf %40, %7 : vector<64x512xf32>
    %cst_23 = arith.constant 0.000000e+00 : f32
    %42 = vector.broadcast %cst_23 : f32 to vector<64x512xf32>
    %43 = arith.maximumf %41, %42 : vector<64x512xf32>
    %cst_24 = arith.constant dense<0.000000e+00> : vector<3x512xf32>
    %44 = tpu.matmul %0, %43, %cst_24 {dimension_numbers = #tpu.dot_dimension_numbers<[1], [0], [0], [1], [0, 0, 1, 1], [], []>} : vector<3x64xf32>, vector<64x512xf32>, vector<3x512xf32> -> vector<3x512xf32>
    %45 = vector.broadcast %1 : vector<3x1xf32> to vector<3x512xf32>
    %46 = arith.addf %44, %45 : vector<3x512xf32>
    %c0_25 = arith.constant 0 : index
    %c1536_26 = arith.constant 1536 : index
    %47 = vector.load %arg6[%c0_25, %c1536_26] : memref<3x2048xf32, #tpu.memory_space<vmem>>, vector<3x512xf32>
    tpu.vector_store %arg6[%c0_25, %c1536_26], %46 {strides = array<i32>} : memref<3x2048xf32, #tpu.memory_space<vmem>>, vector<3x512xf32>,
    return
  }
  func.func @transform_0(%arg0: i32) -> (i32, i32) {
    %c0_i32 = arith.constant 0 : i32
    %c0_i32_0 = arith.constant 0 : i32
    return %c0_i32, %arg0 : i32, i32
  }
  func.func @transform_1(%arg0: i32) -> (i32, i32) {
    %c0_i32 = arith.constant 0 : i32
    %c0_i32_0 = arith.constant 0 : i32
    %c0_i32_1 = arith.constant 0 : i32
    return %c0_i32, %c0_i32_0 : i32, i32
  }
  func.func @transform_2(%arg0: i32) -> (i32, i32) {
    %c0_i32 = arith.constant 0 : i32
    %c0_i32_0 = arith.constant 0 : i32
    %c0_i32_1 = arith.constant 0 : i32
    return %c0_i32, %c0_i32_0 : i32, i32
  }
  func.func @transform_3(%arg0: i32) -> (i32, i32) {
    %c0_i32 = arith.constant 0 : i32
    %c0_i32_0 = arith.constant 0 : i32
    %c0_i32_1 = arith.constant 0 : i32
    return %c0_i32, %c0_i32_0 : i32, i32
  }
  func.func @transform_4(%arg0: i32) -> (i32, i32) {
    %c0_i32 = arith.constant 0 : i32
    %c0_i32_0 = arith.constant 0 : i32
    %c0_i32_1 = arith.constant 0 : i32
    return %c0_i32, %c0_i32_0 : i32, i32
  }
  func.func @transform_5(%arg0: i32) -> (i32, i32) {
    %c0_i32 = arith.constant 0 : i32
    %c0_i32_0 = arith.constant 0 : i32
    return %c0_i32, %arg0 : i32, i32
  }
}

</mosaic_0001>

<llo_original>
// kernel: neg.1
$region0: #{neg.1}
  #allocation2 [shape = 's32[1]{0}', space=sflag, size = 0x4, scoped, tag = 'scoped memory for neg.1']
  %s0 = inlined_call_operand.hbm [shape: f32[64,1], index: 0, kind: input, shape index: {}]
  %s1 = inlined_call_operand.vmem [shape: f32[64,1], index: 1, kind: output, shape index: {}]
  $region1: #{neg.1} parent=0
    #allocation0 [shape = 'u8[512]{0}', space=vmem, size = 0x400, scoped, tag = 'operand span for operand 0']
    #allocation1 [shape = 's32[1]{0}', space=sflag, size = 0x4, scoped, tag = 'scoped memory for neg.1']
    %2 = vsyncpa [#allocation1], 0
    %s4 = ssub.s32 16, 16
    %5 = vsyncadd [#allocation1], %s4
    %s7 = sshll.u32 [#allocation0], 4
    %s8 = int_to_ptr.vmem [resolvable:$true] %s7
    %10 = dma.hbm_to_vmem [thread:$0]  %s0, 16, %s8, [#allocation1]
    %11 = dma.done [#allocation1], 16
    %v12 = vld [vmem:[#allocation0] sm:$0x1]
    %13 = xla_tuple %v12
    %14 = xla_tuple %13
    %v15 = vxor.u32 %v12, 2147483648
    %16 = xla_tuple %v15
    %17 = vst [vmem:[%s1] sm:$0x1] %v15
    %18 = vsyncpa [#allocation1], 1

// kernel: squeeze.1
$region0: #{squeeze.1}
  %s0 = inlined_call_operand.vmem [shape: f32[1,1,64,64], index: 0, kind: input, shape index: {}]
  %s1 = inlined_call_operand.vmem [shape: f32[1,4096], index: 1, kind: output, shape index: {}]
  $region1: #{squeeze.1} parent=0
    #allocation0 [shape = 'u8[131072]{0}', space=vmem, size = 0x20000, scoped, tag = 'scoped mem for output reshape']
    %v2 = vld [vmem:[%s0] ss:$2 sm:$0xff]
    %vm3 = vcmask 523264
    %4 = vst.msk [vmem:[#allocation0] ss:$8 sm:$0xf] %vm3, %v2
    %5 = vst.msk [vmem:[#allocation0] ss:$8 sm:$0xf0] %vm3, %v2
    %s6 = scalar_lea.vmem %s0, 16
    %v7 = vld [vmem:[%s6] ss:$2 sm:$0xff]
    %vm8 = vcmask 523264
    %s9 = scalar_lea.vmem [#allocation0], 64
    %10 = vst.msk [vmem:[%s9] ss:$8 sm:$0xf] %vm8, %v7
    %s11 = scalar_lea.vmem [#allocation0], 64
    %12 = vst.msk [vmem:[%s11] ss:$8 sm:$0xf0] %vm8, %v7
    %s13 = scalar_lea.vmem %s0, 32
    %v14 = vld [vmem:[%s13] ss:$2 sm:$0xff]
    %vm15 = vcmask 523264
    %s16 = scalar_lea.vmem [#allocation0], 128
    %17 = vst.msk [vmem:[%s16] ss:$8 sm:$0xf] %vm15, %v14
    %s18 = scalar_lea.vmem [#allocation0], 128
    %19 = vst.msk [vmem:[%s18] ss:$8 sm:$0xf0] %vm15, %v14
    %s20 = scalar_lea.vmem %s0, 48
    %v21 = vld [vmem:[%s20] ss:$2 sm:$0xff]
    %vm22 = vcmask 523264
    %s23 = scalar_lea.vmem [#allocation0], 192
    %24 = vst.msk [vmem:[%s23] ss:$8 sm:$0xf] %vm22, %v21
    %s25 = scalar_lea.vmem [#allocation0], 192
    %26 = vst.msk [vmem:[%s25] ss:$8 sm:$0xf0] %vm22, %v21
    %s27 = scalar_lea.vmem %s0, 1
    %v28 = vld [vmem:[%s27] ss:$2 sm:$0xff]
    %29 = vrot.lane.b32.xlu0 %v28, 64
    %v30 = vpop.permute.xlu0 %29
    %vm31 = vcmask 1048064
    %32 = vst.msk [vmem:[#allocation0] ss:$8 sm:$0xf] %vm31, %v30
    %33 = vst.msk [vmem:[#allocation0] ss:$8 sm:$0xf0] %vm31, %v30
    %s34 = scalar_lea.vmem %s0, 17
    %v35 = vld [vmem:[%s34] ss:$2 sm:$0xff]
    %36 = vrot.lane.b32.xlu0 %v35, 64
    %v37 = vpop.permute.xlu0 %36
    %vm38 = vcmask 1048064
    %s39 = scalar_lea.vmem [#allocation0], 64
    %40 = vst.msk [vmem:[%s39] ss:$8 sm:$0xf] %vm38, %v37
    %s41 = scalar_lea.vmem [#allocation0], 64
    %42 = vst.msk [vmem:[%s41] ss:$8 sm:$0xf0] %vm38, %v37
    %s43 = scalar_lea.vmem %s0, 33
    %v44 = vld [vmem:[%s43] ss:$2 sm:$0xff]
    %45 = vrot.lane.b32.xlu0 %v44, 64
    %v46 = vpop.permute.xlu0 %45
    %vm47 = vcmask 1048064
    %s48 = scalar_lea.vmem [#allocation0], 128
    %49 = vst.msk [vmem:[%s48] ss:$8 sm:$0xf] %vm47, %v46
    %s50 = scalar_lea.vmem [#allocation0], 128
    %51 = vst.msk [vmem:[%s50] ss:$8 sm:$0xf0] %vm47, %v46
    %s52 = scalar_lea.vmem %s0, 49
    %v53 = vld [vmem:[%s52] ss:$2 sm:$0xff]
    %54 = vrot.lane.b32.xlu0 %v53, 64
    %v55 = vpop.permute.xlu0 %54
    %vm56 = vcmask 1048064
    %s57 = scalar_lea.vmem [#allocation0], 192
    %58 = vst.msk [vmem:[%s57] ss:$8 sm:$0xf] %vm56, %v55
    %s59 = scalar_lea.vmem [#allocation0], 192
    %60 = vst.msk [vmem:[%s59] ss:$8 sm:$0xf0] %vm56, %v55
    %s62 = sshllo.u32 0, 1
    %v64 = vld [vmem:[#allocation0] sm:%s62]
    %s65 = sshllo.u32 0, 1
    %66 = vst [vmem:[%s1] sm:%s65] %v64
    %s67 = scalar_lea.vmem [#allocation0], 8
    %v68 = vld [vmem:[%s67] sm:%s62]
    %s69 = sshllo.u32 0, 1
    %s70 = scalar_lea.vmem %s1, 1
    %71 = vst [vmem:[%s70] sm:%s69] %v68
    %s72 = scalar_lea.vmem [#allocation0], 16
    %v73 = vld [vmem:[%s72] sm:%s62]
    %s74 = sshllo.u32 0, 1
    %s75 = smul.addr 1, 2
    %s76 = scalar_lea.vmem %s1, %s75
    %77 = vst [vmem:[%s76] sm:%s74] %v73
    %s78 = scalar_lea.vmem [#allocation0], 24
    %v79 = vld [vmem:[%s78] sm:%s62]
    %s80 = sshllo.u32 0, 1
    %s81 = smul.addr 1, 3
    %s82 = scalar_lea.vmem %s1, %s81
    %83 = vst [vmem:[%s82] sm:%s80] %v79
    %s84 = scalar_lea.vmem [#allocation0], 32
    %v85 = vld [vmem:[%s84] sm:%s62]
    %s86 = sshllo.u32 0, 1
    %s87 = smul.addr 1, 4
    %s88 = scalar_lea.vmem %s1, %s87
    %89 = vst [vmem:[%s88] sm:%s86] %v85
    %s90 = scalar_lea.vmem [#allocation0], 40
    %v91 = vld [vmem:[%s90] sm:%s62]
    %s92 = sshllo.u32 0, 1
    %s93 = smul.addr 1, 5
    %s94 = scalar_lea.vmem %s1, %s93
    %95 = vst [vmem:[%s94] sm:%s92] %v91
    %s96 = scalar_lea.vmem [#allocation0], 48
    %v97 = vld [vmem:[%s96] sm:%s62]
    %s98 = sshllo.u32 0, 1
    %s99 = smul.addr 1, 6
    %s100 = scalar_lea.vmem %s1, %s99
    %101 = vst [vmem:[%s100] sm:%s98] %v97
    %s102 = scalar_lea.vmem [#allocation0], 56
    %v103 = vld [vmem:[%s102] sm:%s62]
    %s104 = sshllo.u32 0, 1
    %s105 = smul.addr 1, 7
    %s106 = scalar_lea.vmem %s1, %s105
    %107 = vst [vmem:[%s106] sm:%s104] %v103
    %s108 = scalar_lea.vmem [#allocation0], 64
    %v109 = vld [vmem:[%s108] sm:%s62]
    %s110 = sshllo.u32 0, 1
    %s111 = smul.addr 1, 8
    %s112 = scalar_lea.vmem %s1, %s111
    %113 = vst [vmem:[%s112] sm:%s110] %v109
    %s114 = scalar_lea.vmem [#allocation0], 72
    %v115 = vld [vmem:[%s114] sm:%s62]
    %s116 = sshllo.u32 0, 1
    %s117 = smul.addr 1, 9
    %s118 = scalar_lea.vmem %s1, %s117
    %119 = vst [vmem:[%s118] sm:%s116] %v115
    %s120 = scalar_lea.vmem [#allocation0], 80
    %v121 = vld [vmem:[%s120] sm:%s62]
    %s122 = sshllo.u32 0, 1
    %s123 = smul.addr 1, 10
    %s124 = scalar_lea.vmem %s1, %s123
    %125 = vst [vmem:[%s124] sm:%s122] %v121
    %s126 = scalar_lea.vmem [#allocation0], 88
    %v127 = vld [vmem:[%s126] sm:%s62]
    %s128 = sshllo.u32 0, 1
    %s129 = smul.addr 1, 11
    %s130 = scalar_lea.vmem %s1, %s129
    %131 = vst [vmem:[%s130] sm:%s128] %v127
    %s132 = scalar_lea.vmem [#allocation0], 96
    %v133 = vld [vmem:[%s132] sm:%s62]
    %s134 = sshllo.u32 0, 1
    %s135 = smul.addr 1, 12
    %s136 = scalar_lea.vmem %s1, %s135
    %137 = vst [vmem:[%s136] sm:%s134] %v133
    %s138 = scalar_lea.vmem [#allocation0], 104
    %v139 = vld [vmem:[%s138] sm:%s62]
    %s140 = sshllo.u32 0, 1
    %s141 = smul.addr 1, 13
    %s142 = scalar_lea.vmem %s1, %s141
    %143 = vst [vmem:[%s142] sm:%s140] %v139
    %s144 = scalar_lea.vmem [#allocation0], 112
    %v145 = vld [vmem:[%s144] sm:%s62]
    %s146 = sshllo.u32 0, 1
    %s147 = smul.addr 1, 14
    %s148 = scalar_lea.vmem %s1, %s147
    %149 = vst [vmem:[%s148] sm:%s146] %v145
    %s150 = scalar_lea.vmem [#allocation0], 120
    %v151 = vld [vmem:[%s150] sm:%s62]
    %s152 = sshllo.u32 0, 1
    %s153 = smul.addr 1, 15
    %s154 = scalar_lea.vmem %s1, %s153
    %155 = vst [vmem:[%s154] sm:%s152] %v151
    %s156 = scalar_lea.vmem [#allocation0], 128
    %v157 = vld [vmem:[%s156] sm:%s62]
    %s158 = sshllo.u32 0, 1
    %s159 = smul.addr 1, 16
    %s160 = scalar_lea.vmem %s1, %s159
    %161 = vst [vmem:[%s160] sm:%s158] %v157
    %s162 = scalar_lea.vmem [#allocation0], 136
    %v163 = vld [vmem:[%s162] sm:%s62]
    %s164 = sshllo.u32 0, 1
    %s165 = smul.addr 1, 17
    %s166 = scalar_lea.vmem %s1, %s165
    %167 = vst [vmem:[%s166] sm:%s164] %v163
    %s168 = scalar_lea.vmem [#allocation0], 144
    %v169 = vld [vmem:[%s168] sm:%s62]
    %s170 = sshllo.u32 0, 1
    %s171 = smul.addr 1, 18
    %s172 = scalar_lea.vmem %s1, %s171
    %173 = vst [vmem:[%s172] sm:%s170] %v169
    %s174 = scalar_lea.vmem [#allocation0], 152
    %v175 = vld [vmem:[%s174] sm:%s62]
    %s176 = sshllo.u32 0, 1
    %s177 = smul.addr 1, 19
    %s178 = scalar_lea.vmem %s1, %s177
    %179 = vst [vmem:[%s178] sm:%s176] %v175
    %s180 = scalar_lea.vmem [#allocation0], 160
    %v181 = vld [vmem:[%s180] sm:%s62]
    %s182 = sshllo.u32 0, 1
    %s183 = smul.addr 1, 20
    %s184 = scalar_lea.vmem %s1, %s183
    %185 = vst [vmem:[%s184] sm:%s182] %v181
    %s186 = scalar_lea.vmem [#allocation0], 168
    %v187 = vld [vmem:[%s186] sm:%s62]
    %s188 = sshllo.u32 0, 1
    %s189 = smul.addr 1, 21
    %s190 = scalar_lea.vmem %s1, %s189
    %191 = vst [vmem:[%s190] sm:%s188] %v187
    %s192 = scalar_lea.vmem [#allocation0], 176
    %v193 = vld [vmem:[%s192] sm:%s62]
    %s194 = sshllo.u32 0, 1
    %s195 = smul.addr 1, 22
    %s196 = scalar_lea.vmem %s1, %s195
    %197 = vst [vmem:[%s196] sm:%s194] %v193
    %s198 = scalar_lea.vmem [#allocation0], 184
    %v199 = vld [vmem:[%s198] sm:%s62]
    %s200 = sshllo.u32 0, 1
    %s201 = smul.addr 1, 23
    %s202 = scalar_lea.vmem %s1, %s201
    %203 = vst [vmem:[%s202] sm:%s200] %v199
    %s204 = scalar_lea.vmem [#allocation0], 192
    %v205 = vld [vmem:[%s204] sm:%s62]
    %s206 = sshllo.u32 0, 1
    %s207 = smul.addr 1, 24
    %s208 = scalar_lea.vmem %s1, %s207
    %209 = vst [vmem:[%s208] sm:%s206] %v205
    %s210 = scalar_lea.vmem [#allocation0], 200
    %v211 = vld [vmem:[%s210] sm:%s62]
    %s212 = sshllo.u32 0, 1
    %s213 = smul.addr 1, 25
    %s214 = scalar_lea.vmem %s1, %s213
    %215 = vst [vmem:[%s214] sm:%s212] %v211
    %s216 = scalar_lea.vmem [#allocation0], 208
    %v217 = vld [vmem:[%s216] sm:%s62]
    %s218 = sshllo.u32 0, 1
    %s219 = smul.addr 1, 26
    %s220 = scalar_lea.vmem %s1, %s219
    %221 = vst [vmem:[%s220] sm:%s218] %v217
    %s222 = scalar_lea.vmem [#allocation0], 216
    %v223 = vld [vmem:[%s222] sm:%s62]
    %s224 = sshllo.u32 0, 1
    %s225 = smul.addr 1, 27
    %s226 = scalar_lea.vmem %s1, %s225
    %227 = vst [vmem:[%s226] sm:%s224] %v223
    %s228 = scalar_lea.vmem [#allocation0], 224
    %v229 = vld [vmem:[%s228] sm:%s62]
    %s230 = sshllo.u32 0, 1
    %s231 = smul.addr 1, 28
    %s232 = scalar_lea.vmem %s1, %s231
    %233 = vst [vmem:[%s232] sm:%s230] %v229
    %s234 = scalar_lea.vmem [#allocation0], 232
    %v235 = vld [vmem:[%s234] sm:%s62]
    %s236 = sshllo.u32 0, 1
    %s237 = smul.addr 1, 29
    %s238 = scalar_lea.vmem %s1, %s237
    %239 = vst [vmem:[%s238] sm:%s236] %v235
    %s240 = scalar_lea.vmem [#allocation0], 240
    %v241 = vld [vmem:[%s240] sm:%s62]
    %s242 = sshllo.u32 0, 1
    %s243 = smul.addr 1, 30
    %s244 = scalar_lea.vmem %s1, %s243
    %245 = vst [vmem:[%s244] sm:%s242] %v241
    %s246 = scalar_lea.vmem [#allocation0], 248
    %v247 = vld [vmem:[%s246] sm:%s62]
    %s248 = sshllo.u32 0, 1
    %s249 = smul.addr 1, 31
    %s250 = scalar_lea.vmem %s1, %s249
    %251 = vst [vmem:[%s250] sm:%s248] %v247

// kernel: position_encoder_forward.1
$region0: #{position_encoder_forward.1}
  #allocation0 [shape = 'u32[]', space=smem, size = 0x4, offset = 0x4, fixed_abs, tag = 'smem constant byte address 0x4 - core index']
  #allocation1 [shape = 'u32[144,128]{1,0:T(1,128)}', space=vmem, size = 0x12000, scoped, tag = 'internal scratch']
  %s0 = inlined_call_operand.vmem [shape: f32[1,4096], index: 0, kind: input, shape index: {}]
  %s1 = inlined_call_operand.vmem [shape: f32[64,1], index: 1, kind: input, shape index: {}]
  %s2 = inlined_call_operand.vmem [shape: f32[64,1], index: 2, kind: input, shape index: {}]
  %s3 = inlined_call_operand.hbm [shape: f32[3,64], index: 3, kind: input, shape index: {}]
  %s4 = inlined_call_operand.vmem [shape: f32[3,1], index: 4, kind: input, shape index: {}]
  %s5 = inlined_call_operand.vmem [shape: f32[3,4096], index: 5, kind: output, shape index: {}]
  %s6 = sld [smem:[#allocation0]]
  $region57: #{position_encoder_forward.1} parent=0
    _
  %s8 = ssub.s32 1, %s6
  %s9 = scalar_select 0, %s8, %s6
  $region1: #{position_encoder_forward.1} parent=0
    #allocation2 [shape = 'u8[2048]{0}', space=vmem, size = 0x800, scoped, tag = 'input window, operand 3, single buffered']
    #allocation3 [shape = 's32[2]{0}', space=sflag, size = 0x8, scoped, tag = 'scoped memory for position_encoder_forward.1']
    %10 = vsyncpa [#allocation3], 0
    loop: start=0, step=1, limit=4
    $region2: #{position_encoder_forward.1} parent=1 // loop_pre_header
      _
    $region3: #{position_encoder_forward.1} parent=1 // loop_header
      %s12 = sphi 0, %s16
      %p13 = scmp.ge.s32.totalorder %s12, 4
      %s22 = sphi 0, %s24
      %s25 = sphi 0, %s22
      %s26 = sphi 0, %s25
      %s42 = sphi 0, %s26
      %s46 = sphi 0, %s46
      %s48 = sphi 0, %s46
      %s49 = sphi 0, %s48
      %s63 = sphi 0, %s49
      %s67 = sphi 0, %s67
      %s69 = sphi 0, %s67
      %s70 = sphi 0, %s69
      %s84 = sphi 0, %s70
      %s88 = sphi 0, %s88
      %s90 = sphi 0, %s88
      %s91 = sphi 0, %s90
      %s105 = sphi 0, %s91
      %s109 = sphi 0, %s109
      %s111 = sphi 0, %s109
      %s112 = sphi 0, %s111
      %s126 = sphi 0, %s112
      %s132 = sphi 0, %s134
      %s135 = sphi 0, %s132
      %s136 = sphi 0, %s135
      %s152 = sphi 0, %s136
    $region4: #{position_encoder_forward.1} parent=1 // loop_header_branch
      %15 = sbr.rel (%p13) target = $region8
    $region5: #{position_encoder_forward.1} parent=1 // loop_body
      %s17 = ssub.s32 %s12, 1
      %s18 = ssub.s32 %s12, 2
      %s19 = sadd.s32 %s12, 1
      %s20 = ssub.s32 %s12, %s19
      %p21 = scmp.eq.s32.totalorder %s20, 0
      %s23 = sadd.s32 %s22, 1
      %s24 = scalar_select %p21, %s22, %s23
      %p27 = pneg %p21
      %p28 = scmp.eq.s32.totalorder %s12, 1
      %p29 = por %p27, %p28
      %p30 = scmp.ne.s32.totalorder %s22, %s25
      %p31 = scmp.eq.s32.totalorder %s12, 0
      %p32 = por %p30, %p31
      %p33 = scmp.ne.s32.totalorder %s22, %s25
      %p34 = scmp.eq.s32.totalorder %s17, 1
      %p35 = por %p33, %p34
      %p36 = scmp.ne.s32.totalorder %s25, %s26
      %p37 = scmp.eq.s32.totalorder %s17, 0
      %p38 = por %p36, %p37
      %p39 = scmp.ne.s32.totalorder %s25, %s26
      %p40 = scmp.eq.s32.totalorder %s18, 1
      %p41 = por %p39, %p40
      %p43 = scmp.ne.s32.totalorder %s26, %s42
      %p44 = scmp.eq.s32.totalorder %s18, 0
      %p45 = por %p43, %p44
      %s47 = sadd.s32 %s46, 1
      %p50 = scmp.eq.s32.totalorder %s12, 1
      %p51 = scmp.ne.s32.totalorder %s46, %s48
      %p52 = scmp.eq.s32.totalorder %s12, 0
      %p53 = por %p51, %p52
      %p54 = scmp.ne.s32.totalorder %s46, %s48
      %p55 = scmp.eq.s32.totalorder %s17, 1
      %p56 = por %p54, %p55
      %p57 = scmp.ne.s32.totalorder %s48, %s49
      %p58 = scmp.eq.s32.totalorder %s17, 0
      %p59 = por %p57, %p58
      %p60 = scmp.ne.s32.totalorder %s48, %s49
      %p61 = scmp.eq.s32.totalorder %s18, 1
      %p62 = por %p60, %p61
      %p64 = scmp.ne.s32.totalorder %s49, %s63
      %p65 = scmp.eq.s32.totalorder %s18, 0
      %p66 = por %p64, %p65
      %s68 = sadd.s32 %s67, 1
      %p71 = scmp.eq.s32.totalorder %s12, 1
      %p72 = scmp.ne.s32.totalorder %s67, %s69
      %p73 = scmp.eq.s32.totalorder %s12, 0
      %p74 = por %p72, %p73
      %p75 = scmp.ne.s32.totalorder %s67, %s69
      %p76 = scmp.eq.s32.totalorder %s17, 1
      %p77 = por %p75, %p76
      %p78 = scmp.ne.s32.totalorder %s69, %s70
      %p79 = scmp.eq.s32.totalorder %s17, 0
      %p80 = por %p78, %p79
      %p81 = scmp.ne.s32.totalorder %s69, %s70
      %p82 = scmp.eq.s32.totalorder %s18, 1
      %p83 = por %p81, %p82
      %p85 = scmp.ne.s32.totalorder %s70, %s84
      %p86 = scmp.eq.s32.totalorder %s18, 0
      %p87 = por %p85, %p86
      %s89 = sadd.s32 %s88, 1
      %p92 = scmp.eq.s32.totalorder %s12, 1
      %p93 = scmp.ne.s32.totalorder %s88, %s90
      %p94 = scmp.eq.s32.totalorder %s12, 0
      %p95 = por %p93, %p94
      %p96 = scmp.ne.s32.totalorder %s88, %s90
      %p97 = scmp.eq.s32.totalorder %s17, 1
      %p98 = por %p96, %p97
      %p99 = scmp.ne.s32.totalorder %s90, %s91
      %p100 = scmp.eq.s32.totalorder %s17, 0
      %p101 = por %p99, %p100
      %p102 = scmp.ne.s32.totalorder %s90, %s91
      %p103 = scmp.eq.s32.totalorder %s18, 1
      %p104 = por %p102, %p103
      %p106 = scmp.ne.s32.totalorder %s91, %s105
      %p107 = scmp.eq.s32.totalorder %s18, 0
      %p108 = por %p106, %p107
      %s110 = sadd.s32 %s109, 1
      %p113 = scmp.eq.s32.totalorder %s12, 1
      %p114 = scmp.ne.s32.totalorder %s109, %s111
      %p115 = scmp.eq.s32.totalorder %s12, 0
      %p116 = por %p114, %p115
      %p117 = scmp.ne.s32.totalorder %s109, %s111
      %p118 = scmp.eq.s32.totalorder %s17, 1
      %p119 = por %p117, %p118
      %p120 = scmp.ne.s32.totalorder %s111, %s112
      %p121 = scmp.eq.s32.totalorder %s17, 0
      %p122 = por %p120, %p121
      %p123 = scmp.ne.s32.totalorder %s111, %s112
      %p124 = scmp.eq.s32.totalorder %s18, 1
      %p125 = por %p123, %p124
      %p127 = scmp.ne.s32.totalorder %s112, %s126
      %p128 = scmp.eq.s32.totalorder %s18, 0
      %p129 = por %p127, %p128
      %s130 = ssub.s32 %s12, %s19
      %p131 = scmp.eq.s32.totalorder %s130, 0
      %s133 = sadd.s32 %s132, 1
      %s134 = scalar_select %p131, %s132, %s133
      %p137 = pneg %p131
      %p138 = scmp.eq.s32.totalorder %s12, 1
      %p139 = por %p137, %p138
      %p140 = scmp.ne.s32.totalorder %s132, %s135
      %p141 = scmp.eq.s32.totalorder %s12, 0
      %p142 = por %p140, %p141
      %p143 = scmp.ne.s32.totalorder %s132, %s135
      %p144 = scmp.eq.s32.totalorder %s17, 1
      %p145 = por %p143, %p144
      %p146 = scmp.ne.s32.totalorder %s135, %s136
      %p147 = scmp.eq.s32.totalorder %s17, 0
      %p148 = por %p146, %p147
      %p149 = scmp.ne.s32.totalorder %s135, %s136
      %p150 = scmp.eq.s32.totalorder %s18, 1
      %p151 = por %p149, %p150
      %p153 = scmp.ne.s32.totalorder %s136, %s152
      %p154 = scmp.eq.s32.totalorder %s18, 0
      %p155 = por %p153, %p154
      %p156 = scmp.le.s32.totalorder 1, %s12
      %p157 = scmp.lt.s32.totalorder %s12, 3
      %p158 = pnand %p156, %p157
      %p159 = pneg %p158
      // Predicated region
      $region9: #{position_encoder_forward.1} parent=5 // pred_check
        _
      $region10: #{position_encoder_forward.1} parent=5 // pred_check_branch
        %161 = sbr.rel (%p158) target = $region12
      $region11: #{position_encoder_forward.1} parent=5 // pred_region
        %s162 = ssub.s32 %s12, 1
        // Predicated region
        $region13: #{position_encoder_forward.1} parent=11 // pred_check
          %p163 = pneg %p59
        $region14: #{position_encoder_forward.1} parent=11 // pred_check_branch
          %165 = sbr.rel (%p163) target = $region16
        $region15: #{position_encoder_forward.1} parent=11 // pred_region
          _
        $region16: #{position_encoder_forward.1} parent=11 // pred_fallthru
          _
        // Predicated region
        $region17: #{position_encoder_forward.1} parent=11 // pred_check
          %p166 = pneg %p80
        $region18: #{position_encoder_forward.1} parent=11 // pred_check_branch
          %168 = sbr.rel (%p166) target = $region20
        $region19: #{position_encoder_forward.1} parent=11 // pred_region
          _
        $region20: #{position_encoder_forward.1} parent=11 // pred_fallthru
          _
        // Predicated region
        $region21: #{position_encoder_forward.1} parent=11 // pred_check
          %p169 = pneg %p101
        $region22: #{position_encoder_forward.1} parent=11 // pred_check_branch
          %171 = sbr.rel (%p169) target = $region24
        $region23: #{position_encoder_forward.1} parent=11 // pred_region
          %s173 = ssub.s32 64, 64
          %174 = vsyncadd [#allocation3], %s173
          %s176 = sshll.u32 [#allocation2], 4
          %s177 = int_to_ptr.vmem [resolvable:$true] %s176
          %179 = dma.hbm_to_vmem [thread:$0]  %s3, 64, %s177, [#allocation3]
        $region24: #{position_encoder_forward.1} parent=11 // pred_fallthru
          _
        // Predicated region
        $region25: #{position_encoder_forward.1} parent=11 // pred_check
          %p180 = pneg %p122
        $region26: #{position_encoder_forward.1} parent=11 // pred_check_branch
          %182 = sbr.rel (%p180) target = $region28
        $region27: #{position_encoder_forward.1} parent=11 // pred_region
          _
        $region28: #{position_encoder_forward.1} parent=11 // pred_fallthru
          _
      $region12: #{position_encoder_forward.1} parent=5 // pred_fallthru
        _
      %p183 = scmp.lt.s32.totalorder %s12, 2
      // Predicated region
      $region29: #{position_encoder_forward.1} parent=5 // pred_check
        %p184 = pneg %p183
      $region30: #{position_encoder_forward.1} parent=5 // pred_check_branch
        %186 = sbr.rel (%p184) target = $region32
      $region31: #{position_encoder_forward.1} parent=5 // pred_region
        // Predicated region
        $region33: #{position_encoder_forward.1} parent=31 // pred_check
          %p187 = pneg %p32
        $region34: #{position_encoder_forward.1} parent=31 // pred_check_branch
          %189 = sbr.rel (%p187) target = $region36
        $region35: #{position_encoder_forward.1} parent=31 // pred_region
          %s190 = smul.u32 16, %s12
          %p191 = scmp.lt.s32.totalorder %s190, 31
          %s192 = scalar_select %p191, %s190, 31
          %s193 = scalar_lea.vmem %s0, %s192
          %s194 = smul.u32 16, %s12
        $region36: #{position_encoder_forward.1} parent=31 // pred_fallthru
          _
      $region32: #{position_encoder_forward.1} parent=5 // pred_fallthru
        _
      %p195 = scmp.le.s32.totalorder 1, %s12
      %p196 = scmp.lt.s32.totalorder %s12, 3
      %p197 = pnand %p195, %p196
      %p198 = pneg %p197
      // Predicated region
      $region37: #{position_encoder_forward.1} parent=5 // pred_check
        _
      $region38: #{position_encoder_forward.1} parent=5 // pred_check_branch
        %200 = sbr.rel (%p197) target = $region40
      $region39: #{position_encoder_forward.1} parent=5 // pred_region
        %s201 = ssub.s32 %s12, 1
        // Predicated region
        $region41: #{position_encoder_forward.1} parent=39 // pred_check
          %p202 = pneg %p101
        $region42: #{position_encoder_forward.1} parent=39 // pred_check_branch
          %204 = sbr.rel (%p202) target = $region44
        $region43: #{position_encoder_forward.1} parent=39 // pred_region
          %205 = dma.done [#allocation3], 64
        $region44: #{position_encoder_forward.1} parent=39 // pred_fallthru
          _
        %s206 = smul.u32 16, %s17
        %p207 = scmp.lt.s32.totalorder %s206, 31
        %s208 = scalar_select %p207, %s206, 31
        %s209 = scalar_lea.vmem %s0, %s208
        %p210 = pneg %p38
        %p211 = pneg %p35
        %p212 = pneg %p59
        %p213 = pneg %p56
        %p214 = pneg %p80
        %p215 = pneg %p77
        %p216 = pneg %p101
        %p217 = pneg %p98
        %p218 = pneg %p122
        %p219 = pneg %p119
        %p220 = pneg %p148
        %p221 = pneg %p145
        %s222 = smul.u32 16, %s17
        %p223 = scmp.lt.s32.totalorder %s222, 31
        %s224 = scalar_select %p223, %s222, 31
        %s225 = smul.addr %s224, 4
        %s226 = scalar_lea.vmem %s5, %s225
        %s227 = smul.u32 16, %s17
        %p228 = scmp.lt.s32.totalorder %s227, 31
        %s229 = scalar_select %p228, %s227, 31
        %s230 = scalar_lea.vmem %s0, %s229
        %s231 = smul.u32 16, %s17
        %s232 = smul.u32 16, %s17
        %p233 = scmp.lt.s32.totalorder %s232, 31
        %s234 = scalar_select %p233, %s232, 31
        %s235 = smul.addr %s234, 4
        %s236 = scalar_lea.vmem %s5, %s235
        %s237 = smul.u32 16, %s17
        %v238 = vld [vmem:[#allocation2] sm:$0x7]
        %v239 = vld [vmem:[%s4] sm:$0x7]
        %v240 = vld [vmem:[%s1] sm:$0xff]
        %v241 = vld [vmem:[%s1 + $0x8] sm:$0xff]
        %v242 = vld [vmem:[%s1 + $0x10] sm:$0xff]
        %v243 = vld [vmem:[%s1 + $0x18] sm:$0xff]
        %v244 = vld [vmem:[%s1 + $0x20] sm:$0xff]
        %v245 = vld [vmem:[%s1 + $0x28] sm:$0xff]
        %v246 = vld [vmem:[%s1 + $0x30] sm:$0xff]
        %v247 = vld [vmem:[%s1 + $0x38] sm:$0xff]
        %249 = vset.pattern.permute.xlu0 0
        %250 = vperm.xlu0 %249, %v240
        %v251 = vpop.permute.xlu0 %250
        %254 = vset.pattern.permute.xlu0 0
        %255 = vperm.xlu0 %254, %v241
        %v256 = vpop.permute.xlu0 %255
        %259 = vset.pattern.permute.xlu0 0
        %260 = vperm.xlu0 %259, %v242
        %v261 = vpop.permute.xlu0 %260
        %264 = vset.pattern.permute.xlu0 0
        %265 = vperm.xlu0 %264, %v243
        %v266 = vpop.permute.xlu0 %265
        %269 = vset.pattern.permute.xlu0 0
        %270 = vperm.xlu0 %269, %v244
        %v271 = vpop.permute.xlu0 %270
        %274 = vset.pattern.permute.xlu0 0
        %275 = vperm.xlu0 %274, %v245
        %v276 = vpop.permute.xlu0 %275
        %279 = vset.pattern.permute.xlu0 0
        %280 = vperm.xlu0 %279, %v246
        %v281 = vpop.permute.xlu0 %280
        %284 = vset.pattern.permute.xlu0 0
        %285 = vperm.xlu0 %284, %v247
        %v286 = vpop.permute.xlu0 %285
        %v288 = vld [vmem:[%s2] sm:$0xff]
        %v289 = vld [vmem:[%s2 + $0x8] sm:$0xff]
        %v290 = vld [vmem:[%s2 + $0x10] sm:$0xff]
        %v291 = vld [vmem:[%s2 + $0x18] sm:$0xff]
        %v292 = vld [vmem:[%s2 + $0x20] sm:$0xff]
        %v293 = vld [vmem:[%s2 + $0x28] sm:$0xff]
        %v294 = vld [vmem:[%s2 + $0x30] sm:$0xff]
        %v295 = vld [vmem:[%s2 + $0x38] sm:$0xff]
        %297 = vset.pattern.permute.xlu0 0
        %298 = vperm.xlu0 %297, %v288
        %v299 = vpop.permute.xlu0 %298
        %302 = vset.pattern.permute.xlu0 0
        %303 = vperm.xlu0 %302, %v289
        %v304 = vpop.permute.xlu0 %303
        %307 = vset.pattern.permute.xlu0 0
        %308 = vperm.xlu0 %307, %v290
        %v309 = vpop.permute.xlu0 %308
        %312 = vset.pattern.permute.xlu0 0
        %313 = vperm.xlu0 %312, %v291
        %v314 = vpop.permute.xlu0 %313
        %317 = vset.pattern.permute.xlu0 0
        %318 = vperm.xlu0 %317, %v292
        %v319 = vpop.permute.xlu0 %318
        %322 = vset.pattern.permute.xlu0 0
        %323 = vperm.xlu0 %322, %v293
        %v324 = vpop.permute.xlu0 %323
        %327 = vset.pattern.permute.xlu0 0
        %328 = vperm.xlu0 %327, %v294
        %v329 = vpop.permute.xlu0 %328
        %332 = vset.pattern.permute.xlu0 0
        %333 = vperm.xlu0 %332, %v295
        %v334 = vpop.permute.xlu0 %333
        %v336 = vld [vmem:[%s230] sm:$0xf]
        %v338 = vlaneseq
        %v339 = vshrl.u32 %v338, 7
        %v340 = vsub.s32 0, %v339
        %v341 = vrot.slane %v336, %v340
        %v342 = vlaneseq
        %v343 = vshrl.u32 %v342, 7
        %v344 = vsub.s32 1, %v343
        %v345 = vrot.slane %v336, %v344
        %v346 = vlaneseq
        %v347 = vshrl.u32 %v346, 7
        %v348 = vsub.s32 2, %v347
        %v349 = vrot.slane %v336, %v348
        %v350 = vlaneseq
        %v351 = vshrl.u32 %v350, 7
        %v352 = vsub.s32 3, %v351
        %v353 = vrot.slane %v336, %v352
        %v358 = vmul.f32 %v251, %v341
        %v359 = vmul.f32 %v251, %v345
        %v360 = vmul.f32 %v251, %v349
        %v361 = vmul.f32 %v251, %v353
        %v362 = vmul.f32 %v256, %v341
        %v363 = vmul.f32 %v256, %v345
        %v364 = vmul.f32 %v256, %v349
        %v365 = vmul.f32 %v256, %v353
        %v366 = vmul.f32 %v261, %v341
        %v367 = vmul.f32 %v261, %v345
        %v368 = vmul.f32 %v261, %v349
        %v369 = vmul.f32 %v261, %v353
        %v370 = vmul.f32 %v266, %v341
        %v371 = vmul.f32 %v266, %v345
        %v372 = vmul.f32 %v266, %v349
        %v373 = vmul.f32 %v266, %v353
        %v374 = vmul.f32 %v271, %v341
        %v375 = vmul.f32 %v271, %v345
        %v376 = vmul.f32 %v271, %v349
        %v377 = vmul.f32 %v271, %v353
        %v378 = vmul.f32 %v276, %v341
        %v379 = vmul.f32 %v276, %v345
        %v380 = vmul.f32 %v276, %v349
        %v381 = vmul.f32 %v276, %v353
        %v382 = vmul.f32 %v281, %v341
        %v383 = vmul.f32 %v281, %v345
        %v384 = vmul.f32 %v281, %v349
        %v385 = vmul.f32 %v281, %v353
        %v386 = vmul.f32 %v286, %v341
        %v387 = vmul.f32 %v286, %v345
        %v388 = vmul.f32 %v286, %v349
        %v389 = vmul.f32 %v286, %v353
        %v390 = vadd.f32 %v358, %v299
        %v391 = vadd.f32 %v359, %v299
        %v392 = vadd.f32 %v360, %v299
        %v393 = vadd.f32 %v361, %v299
        %v394 = vadd.f32 %v362, %v304
        %v395 = vadd.f32 %v363, %v304
        %v396 = vadd.f32 %v364, %v304
        %v397 = vadd.f32 %v365, %v304
        %v398 = vadd.f32 %v366, %v309
        %v399 = vadd.f32 %v367, %v309
        %v400 = vadd.f32 %v368, %v309
        %v401 = vadd.f32 %v369, %v309
        %v402 = vadd.f32 %v370, %v314
        %v403 = vadd.f32 %v371, %v314
        %v404 = vadd.f32 %v372, %v314
        %v405 = vadd.f32 %v373, %v314
        %v406 = vadd.f32 %v374, %v319
        %v407 = vadd.f32 %v375, %v319
        %v408 = vadd.f32 %v376, %v319
        %v409 = vadd.f32 %v377, %v319
        %v410 = vadd.f32 %v378, %v324
        %v411 = vadd.f32 %v379, %v324
        %v412 = vadd.f32 %v380, %v324
        %v413 = vadd.f32 %v381, %v324
        %v414 = vadd.f32 %v382, %v329
        %v415 = vadd.f32 %v383, %v329
        %v416 = vadd.f32 %v384, %v329
        %v417 = vadd.f32 %v385, %v329
        %v418 = vadd.f32 %v386, %v334
        %v419 = vadd.f32 %v387, %v334
        %v420 = vadd.f32 %v388, %v334
        %v421 = vadd.f32 %v389, %v334
        %v422 = vmax.f32 %v390, 0.0
        %v423 = vmax.f32 %v391, 0.0
        %v424 = vmax.f32 %v392, 0.0
        %v425 = vmax.f32 %v393, 0.0
        %v426 = vmax.f32 %v394, 0.0
        %v427 = vmax.f32 %v395, 0.0
        %v428 = vmax.f32 %v396, 0.0
        %v429 = vmax.f32 %v397, 0.0
        %v430 = vmax.f32 %v398, 0.0
        %v431 = vmax.f32 %v399, 0.0
        %v432 = vmax.f32 %v400, 0.0
        %v433 = vmax.f32 %v401, 0.0
        %v434 = vmax.f32 %v402, 0.0
        %v435 = vmax.f32 %v403, 0.0
        %v436 = vmax.f32 %v404, 0.0
        %v437 = vmax.f32 %v405, 0.0
        %v438 = vmax.f32 %v406, 0.0
        %v439 = vmax.f32 %v407, 0.0
        %v440 = vmax.f32 %v408, 0.0
        %v441 = vmax.f32 %v409, 0.0
        %v442 = vmax.f32 %v410, 0.0
        %v443 = vmax.f32 %v411, 0.0
        %v444 = vmax.f32 %v412, 0.0
        %v445 = vmax.f32 %v413, 0.0
        %v446 = vmax.f32 %v414, 0.0
        %v447 = vmax.f32 %v415, 0.0
        %v448 = vmax.f32 %v416, 0.0
        %v449 = vmax.f32 %v417, 0.0
        %v450 = vmax.f32 %v418, 0.0
        %v451 = vmax.f32 %v419, 0.0
        %v452 = vmax.f32 %v420, 0.0
        %v453 = vmax.f32 %v421, 0.0
        %455 = vset.pattern.permute.xlu0 0
        %456 = vperm.xlu0 %455, %v239
        %v457 = vpop.permute.xlu0 %456
        %vm459 = vcmask 523264
        %v461 = vsel %vm459, %v238, 0
        %463 = vmatprep.subr.mxu0 %v423
        %464 = vmatpush1.msra.mxu0 %v422
        %465 = vmatprep.subr.mxu0 %v427
        %466 = vmatpush1.msra.mxu0 %v426
        %467 = vmatprep.subr.mxu0 %v431
        %468 = vmatpush1.msra.mxu0 %v430
        %469 = vmatprep.subr.mxu0 %v435
        %470 = vmatpush1.msra.mxu0 %v434
        %471 = vmatprep.subr.mxu0 %v439
        %472 = vmatpush1.msra.mxu0 %v438
        %473 = vmatprep.subr.mxu0 %v443
        %474 = vmatpush1.msra.mxu0 %v442
        %475 = vmatprep.subr.mxu0 %v447
        %476 = vmatpush1.msra.mxu0 %v446
        %477 = vmatprep.subr.mxu0 %v451
        %478 = vmatpush1.msra.mxu0 %v450
        %479 = vmatprep.subr.mxu0 0.0
        %480 = vmatpush1.msra.mxu0 0.0
        %481 = vmatprep.subr.mxu0 0.0
        %482 = vmatpush1.msra.mxu0 0.0
        %483 = vmatprep.subr.mxu0 0.0
        %484 = vmatpush1.msra.mxu0 0.0
        %485 = vmatprep.subr.mxu0 0.0
        %486 = vmatpush1.msra.mxu0 0.0
        %487 = vmatprep.subr.mxu0 0.0
        %488 = vmatpush1.msra.mxu0 0.0
        %489 = vmatprep.subr.mxu0 0.0
        %490 = vmatpush1.msra.mxu0 0.0
        %491 = vmatprep.subr.mxu0 0.0
        %492 = vmatpush1.msra.mxu0 0.0
        %493 = vmatprep.subr.mxu0 0.0
        %494 = vmatpush1.msra.mxu0 0.0
        %495 = vmatprep.subr.mxu0 0.0
        %496 = vmatpush1.msra.mxu0 0.0
        %497 = vmatprep.subr.mxu0 0.0
        %498 = vmatpush1.msra.mxu0 0.0
        %499 = vmatprep.subr.mxu0 0.0
        %500 = vmatpush1.msra.mxu0 0.0
        %501 = vmatprep.subr.mxu0 0.0
        %502 = vmatpush1.msra.mxu0 0.0
        %503 = vmatprep.subr.mxu0 0.0
        %504 = vmatpush1.msra.mxu0 0.0
        %505 = vmatprep.subr.mxu0 0.0
        %506 = vmatpush1.msra.mxu0 0.0
        %507 = vmatprep.subr.mxu0 0.0
        %508 = vmatpush1.msra.mxu0 0.0
        %509 = vmatprep.subr.mxu0 0.0
        %510 = vmatpush1.msra.mxu0 0.0
        %511 = vmatprep.subr.mxu0 0.0
        %512 = vmatpush1.msra.mxu0 0.0
        %513 = vmatprep.subr.mxu0 0.0
        %514 = vmatpush1.msra.mxu0 0.0
        %515 = vmatprep.subr.mxu0 0.0
        %516 = vmatpush1.msra.mxu0 0.0
        %517 = vmatprep.subr.mxu0 0.0
        %518 = vmatpush1.msra.mxu0 0.0
        %519 = vmatprep.subr.mxu0 0.0
        %520 = vmatpush1.msra.mxu0 0.0
        %521 = vmatprep.subr.mxu0 0.0
        %522 = vmatpush1.msra.mxu0 0.0
        %523 = vmatprep.subr.mxu0 0.0
        %524 = vmatpush1.msra.mxu0 0.0
        %525 = vmatprep.subr.mxu0 0.0
        %526 = vmatpush1.msra.mxu0 0.0
        %527 = vmatprep.mubr.f32.mxu0 0.0
        %528 = vmatmul.mubr.f32.gmra.mrb[0].mxu0 %v461
        %v529 = vpop.f32.mrb[0].mxu0
        %v530 = vadd.f32 %v457, %v529
        %v531 = vpop.f32.mrb[0].mxu0
        %v532 = vadd.f32 %v457, %v531
        %533 = vdwg.mxu0
        %534 = vmatprep.subr.mxu0 %v425
        %535 = vmatpush1.msra.mxu0 %v424
        %536 = vmatprep.subr.mxu0 %v429
        %537 = vmatpush1.msra.mxu0 %v428
        %538 = vmatprep.subr.mxu0 %v433
        %539 = vmatpush1.msra.mxu0 %v432
        %540 = vmatprep.subr.mxu0 %v437
        %541 = vmatpush1.msra.mxu0 %v436
        %542 = vmatprep.subr.mxu0 %v441
        %543 = vmatpush1.msra.mxu0 %v440
        %544 = vmatprep.subr.mxu0 %v445
        %545 = vmatpush1.msra.mxu0 %v444
        %546 = vmatprep.subr.mxu0 %v449
        %547 = vmatpush1.msra.mxu0 %v448
        %548 = vmatprep.subr.mxu0 %v453
        %549 = vmatpush1.msra.mxu0 %v452
        %550 = vmatprep.subr.mxu0 0.0
        %551 = vmatpush1.msra.mxu0 0.0
        %552 = vmatprep.subr.mxu0 0.0
        %553 = vmatpush1.msra.mxu0 0.0
        %554 = vmatprep.subr.mxu0 0.0
        %555 = vmatpush1.msra.mxu0 0.0
        %556 = vmatprep.subr.mxu0 0.0
        %557 = vmatpush1.msra.mxu0 0.0
        %558 = vmatprep.subr.mxu0 0.0
        %559 = vmatpush1.msra.mxu0 0.0
        %560 = vmatprep.subr.mxu0 0.0
        %561 = vmatpush1.msra.mxu0 0.0
        %562 = vmatprep.subr.mxu0 0.0
        %563 = vmatpush1.msra.mxu0 0.0
        %564 = vmatprep.subr.mxu0 0.0
        %565 = vmatpush1.msra.mxu0 0.0
        %566 = vmatprep.subr.mxu0 0.0
        %567 = vmatpush1.msra.mxu0 0.0
        %568 = vmatprep.subr.mxu0 0.0
        %569 = vmatpush1.msra.mxu0 0.0
        %570 = vmatprep.subr.mxu0 0.0
        %571 = vmatpush1.msra.mxu0 0.0
        %572 = vmatprep.subr.mxu0 0.0
        %573 = vmatpush1.msra.mxu0 0.0
        %574 = vmatprep.subr.mxu0 0.0
        %575 = vmatpush1.msra.mxu0 0.0
        %576 = vmatprep.subr.mxu0 0.0
        %577 = vmatpush1.msra.mxu0 0.0
        %578 = vmatprep.subr.mxu0 0.0
        %579 = vmatpush1.msra.mxu0 0.0
        %580 = vmatprep.subr.mxu0 0.0
        %581 = vmatpush1.msra.mxu0 0.0
        %582 = vmatprep.subr.mxu0 0.0
        %583 = vmatpush1.msra.mxu0 0.0
        %584 = vmatprep.subr.mxu0 0.0
        %585 = vmatpush1.msra.mxu0 0.0
        %586 = vmatprep.subr.mxu0 0.0
        %587 = vmatpush1.msra.mxu0 0.0
        %588 = vmatprep.subr.mxu0 0.0
        %589 = vmatpush1.msra.mxu0 0.0
        %590 = vmatprep.subr.mxu0 0.0
        %591 = vmatpush1.msra.mxu0 0.0
        %592 = vmatprep.subr.mxu0 0.0
        %593 = vmatpush1.msra.mxu0 0.0
        %594 = vmatprep.subr.mxu0 0.0
        %595 = vmatpush1.msra.mxu0 0.0
        %596 = vmatprep.subr.mxu0 0.0
        %597 = vmatpush1.msra.mxu0 0.0
        %598 = vmatprep.mubr.f32.mxu0 0.0
        %599 = vmatmul.mubr.f32.gmra.mrb[0].mxu0 %v461
        %v600 = vpop.f32.mrb[0].mxu0
        %v601 = vadd.f32 %v457, %v600
        %v602 = vpop.f32.mrb[0].mxu0
        %v603 = vadd.f32 %v457, %v602
        %604 = vdwg.mxu0
        %v609 = vcombine.low %v530, %v532
        %v610 = vcombine.low %v601, %v603
        %613 = vst [vmem:[%s236] sm:$0x77] %v609
        %614 = vst [vmem:[%s236 + $0x8] sm:$0x77] %v610
        %v615 = vld [vmem:[%s230 + $0x4] sm:$0xf]
        %v617 = vlaneseq
        %v618 = vshrl.u32 %v617, 7
        %v619 = vsub.s32 0, %v618
        %v620 = vrot.slane %v615, %v619
        %v621 = vlaneseq
        %v622 = vshrl.u32 %v621, 7
        %v623 = vsub.s32 1, %v622
        %v624 = vrot.slane %v615, %v623
        %v625 = vlaneseq
        %v626 = vshrl.u32 %v625, 7
        %v627 = vsub.s32 2, %v626
        %v628 = vrot.slane %v615, %v627
        %v629 = vlaneseq
        %v630 = vshrl.u32 %v629, 7
        %v631 = vsub.s32 3, %v630
        %v632 = vrot.slane %v615, %v631
        %v637 = vmul.f32 %v251, %v620
        %v638 = vmul.f32 %v251, %v624
        %v639 = vmul.f32 %v251, %v628
        %v640 = vmul.f32 %v251, %v632
        %v641 = vmul.f32 %v256, %v620
        %v642 = vmul.f32 %v256, %v624
        %v643 = vmul.f32 %v256, %v628
        %v644 = vmul.f32 %v256, %v632
        %v645 = vmul.f32 %v261, %v620
        %v646 = vmul.f32 %v261, %v624
        %v647 = vmul.f32 %v261, %v628
        %v648 = vmul.f32 %v261, %v632
        %v649 = vmul.f32 %v266, %v620
        %v650 = vmul.f32 %v266, %v624
        %v651 = vmul.f32 %v266, %v628
        %v652 = vmul.f32 %v266, %v632
        %v653 = vmul.f32 %v271, %v620
        %v654 = vmul.f32 %v271, %v624
        %v655 = vmul.f32 %v271, %v628
        %v656 = vmul.f32 %v271, %v632
        %v657 = vmul.f32 %v276, %v620
        %v658 = vmul.f32 %v276, %v624
        %v659 = vmul.f32 %v276, %v628
        %v660 = vmul.f32 %v276, %v632
        %v661 = vmul.f32 %v281, %v620
        %v662 = vmul.f32 %v281, %v624
        %v663 = vmul.f32 %v281, %v628
        %v664 = vmul.f32 %v281, %v632
        %v665 = vmul.f32 %v286, %v620
        %v666 = vmul.f32 %v286, %v624
        %v667 = vmul.f32 %v286, %v628
        %v668 = vmul.f32 %v286, %v632
        %v669 = vadd.f32 %v637, %v299
        %v670 = vadd.f32 %v638, %v299
        %v671 = vadd.f32 %v639, %v299
        %v672 = vadd.f32 %v640, %v299
        %v673 = vadd.f32 %v641, %v304
        %v674 = vadd.f32 %v642, %v304
        %v675 = vadd.f32 %v643, %v304
        %v676 = vadd.f32 %v644, %v304
        %v677 = vadd.f32 %v645, %v309
        %v678 = vadd.f32 %v646, %v309
        %v679 = vadd.f32 %v647, %v309
        %v680 = vadd.f32 %v648, %v309
        %v681 = vadd.f32 %v649, %v314
        %v682 = vadd.f32 %v650, %v314
        %v683 = vadd.f32 %v651, %v314
        %v684 = vadd.f32 %v652, %v314
        %v685 = vadd.f32 %v653, %v319
        %v686 = vadd.f32 %v654, %v319
        %v687 = vadd.f32 %v655, %v319
        %v688 = vadd.f32 %v656, %v319
        %v689 = vadd.f32 %v657, %v324
        %v690 = vadd.f32 %v658, %v324
        %v691 = vadd.f32 %v659, %v324
        %v692 = vadd.f32 %v660, %v324
        %v693 = vadd.f32 %v661, %v329
        %v694 = vadd.f32 %v662, %v329
        %v695 = vadd.f32 %v663, %v329
        %v696 = vadd.f32 %v664, %v329
        %v697 = vadd.f32 %v665, %v334
        %v698 = vadd.f32 %v666, %v334
        %v699 = vadd.f32 %v667, %v334
        %v700 = vadd.f32 %v668, %v334
        %v701 = vmax.f32 %v669, 0.0
        %v702 = vmax.f32 %v670, 0.0
        %v703 = vmax.f32 %v671, 0.0
        %v704 = vmax.f32 %v672, 0.0
        %v705 = vmax.f32 %v673, 0.0
        %v706 = vmax.f32 %v674, 0.0
        %v707 = vmax.f32 %v675, 0.0
        %v708 = vmax.f32 %v676, 0.0
        %v709 = vmax.f32 %v677, 0.0
        %v710 = vmax.f32 %v678, 0.0
        %v711 = vmax.f32 %v679, 0.0
        %v712 = vmax.f32 %v680, 0.0
        %v713 = vmax.f32 %v681, 0.0
        %v714 = vmax.f32 %v682, 0.0
        %v715 = vmax.f32 %v683, 0.0
        %v716 = vmax.f32 %v684, 0.0
        %v717 = vmax.f32 %v685, 0.0
        %v718 = vmax.f32 %v686, 0.0
        %v719 = vmax.f32 %v687, 0.0
        %v720 = vmax.f32 %v688, 0.0
        %v721 = vmax.f32 %v689, 0.0
        %v722 = vmax.f32 %v690, 0.0
        %v723 = vmax.f32 %v691, 0.0
        %v724 = vmax.f32 %v692, 0.0
        %v725 = vmax.f32 %v693, 0.0
        %v726 = vmax.f32 %v694, 0.0
        %v727 = vmax.f32 %v695, 0.0
        %v728 = vmax.f32 %v696, 0.0
        %v729 = vmax.f32 %v697, 0.0
        %v730 = vmax.f32 %v698, 0.0
        %v731 = vmax.f32 %v699, 0.0
        %v732 = vmax.f32 %v700, 0.0
        %733 = vmatprep.subr.mxu0 %v702
        %734 = vmatpush1.msra.mxu0 %v701
        %735 = vmatprep.subr.mxu0 %v706
        %736 = vmatpush1.msra.mxu0 %v705
        %737 = vmatprep.subr.mxu0 %v710
        %738 = vmatpush1.msra.mxu0 %v709
        %739 = vmatprep.subr.mxu0 %v714
        %740 = vmatpush1.msra.mxu0 %v713
        %741 = vmatprep.subr.mxu0 %v718
        %742 = vmatpush1.msra.mxu0 %v717
        %743 = vmatprep.subr.mxu0 %v722
        %744 = vmatpush1.msra.mxu0 %v721
        %745 = vmatprep.subr.mxu0 %v726
        %746 = vmatpush1.msra.mxu0 %v725
        %747 = vmatprep.subr.mxu0 %v730
        %748 = vmatpush1.msra.mxu0 %v729
        %749 = vmatprep.subr.mxu0 0.0
        %750 = vmatpush1.msra.mxu0 0.0
        %751 = vmatprep.subr.mxu0 0.0
        %752 = vmatpush1.msra.mxu0 0.0
        %753 = vmatprep.subr.mxu0 0.0
        %754 = vmatpush1.msra.mxu0 0.0
        %755 = vmatprep.subr.mxu0 0.0
        %756 = vmatpush1.msra.mxu0 0.0
        %757 = vmatprep.subr.mxu0 0.0
        %758 = vmatpush1.msra.mxu0 0.0
        %759 = vmatprep.subr.mxu0 0.0
        %760 = vmatpush1.msra.mxu0 0.0
        %761 = vmatprep.subr.mxu0 0.0
        %762 = vmatpush1.msra.mxu0 0.0
        %763 = vmatprep.subr.mxu0 0.0
        %764 = vmatpush1.msra.mxu0 0.0
        %765 = vmatprep.subr.mxu0 0.0
        %766 = vmatpush1.msra.mxu0 0.0
        %767 = vmatprep.subr.mxu0 0.0
        %768 = vmatpush1.msra.mxu0 0.0
        %769 = vmatprep.subr.mxu0 0.0
        %770 = vmatpush1.msra.mxu0 0.0
        %771 = vmatprep.subr.mxu0 0.0
        %772 = vmatpush1.msra.mxu0 0.0
        %773 = vmatprep.subr.mxu0 0.0
        %774 = vmatpush1.msra.mxu0 0.0
        %775 = vmatprep.subr.mxu0 0.0
        %776 = vmatpush1.msra.mxu0 0.0
        %777 = vmatprep.subr.mxu0 0.0
        %778 = vmatpush1.msra.mxu0 0.0
        %779 = vmatprep.subr.mxu0 0.0
        %780 = vmatpush1.msra.mxu0 0.0
        %781 = vmatprep.subr.mxu0 0.0
        %782 = vmatpush1.msra.mxu0 0.0
        %783 = vmatprep.subr.mxu0 0.0
        %784 = vmatpush1.msra.mxu0 0.0
        %785 = vmatprep.subr.mxu0 0.0
        %786 = vmatpush1.msra.mxu0 0.0
        %787 = vmatprep.subr.mxu0 0.0
        %788 = vmatpush1.msra.mxu0 0.0
        %789 = vmatprep.subr.mxu0 0.0
        %790 = vmatpush1.msra.mxu0 0.0
        %791 = vmatprep.subr.mxu0 0.0
        %792 = vmatpush1.msra.mxu0 0.0
        %793 = vmatprep.subr.mxu0 0.0
        %794 = vmatpush1.msra.mxu0 0.0
        %795 = vmatprep.subr.mxu0 0.0
        %796 = vmatpush1.msra.mxu0 0.0
        %797 = vmatprep.mubr.f32.mxu0 0.0
        %798 = vmatmul.mubr.f32.gmra.mrb[0].mxu0 %v461
        %v799 = vpop.f32.mrb[0].mxu0
        %v800 = vadd.f32 %v457, %v799
        %v801 = vpop.f32.mrb[0].mxu0
        %v802 = vadd.f32 %v457, %v801
        %803 = vdwg.mxu0
        %804 = vmatprep.subr.mxu0 %v704
        %805 = vmatpush1.msra.mxu0 %v703
        %806 = vmatprep.subr.mxu0 %v708
        %807 = vmatpush1.msra.mxu0 %v707
        %808 = vmatprep.subr.mxu0 %v712
        %809 = vmatpush1.msra.mxu0 %v711
        %810 = vmatprep.subr.mxu0 %v716
        %811 = vmatpush1.msra.mxu0 %v715
        %812 = vmatprep.subr.mxu0 %v720
        %813 = vmatpush1.msra.mxu0 %v719
        %814 = vmatprep.subr.mxu0 %v724
        %815 = vmatpush1.msra.mxu0 %v723
        %816 = vmatprep.subr.mxu0 %v728
        %817 = vmatpush1.msra.mxu0 %v727
        %818 = vmatprep.subr.mxu0 %v732
        %819 = vmatpush1.msra.mxu0 %v731
        %820 = vmatprep.subr.mxu0 0.0
        %821 = vmatpush1.msra.mxu0 0.0
        %822 = vmatprep.subr.mxu0 0.0
        %823 = vmatpush1.msra.mxu0 0.0
        %824 = vmatprep.subr.mxu0 0.0
        %825 = vmatpush1.msra.mxu0 0.0
        %826 = vmatprep.subr.mxu0 0.0
        %827 = vmatpush1.msra.mxu0 0.0
        %828 = vmatprep.subr.mxu0 0.0
        %829 = vmatpush1.msra.mxu0 0.0
        %830 = vmatprep.subr.mxu0 0.0
        %831 = vmatpush1.msra.mxu0 0.0
        %832 = vmatprep.subr.mxu0 0.0
        %833 = vmatpush1.msra.mxu0 0.0
        %834 = vmatprep.subr.mxu0 0.0
        %835 = vmatpush1.msra.mxu0 0.0
        %836 = vmatprep.subr.mxu0 0.0
        %837 = vmatpush1.msra.mxu0 0.0
        %838 = vmatprep.subr.mxu0 0.0
        %839 = vmatpush1.msra.mxu0 0.0
        %840 = vmatprep.subr.mxu0 0.0
        %841 = vmatpush1.msra.mxu0 0.0
        %842 = vmatprep.subr.mxu0 0.0
        %843 = vmatpush1.msra.mxu0 0.0
        %844 = vmatprep.subr.mxu0 0.0
        %845 = vmatpush1.msra.mxu0 0.0
        %846 = vmatprep.subr.mxu0 0.0
        %847 = vmatpush1.msra.mxu0 0.0
        %848 = vmatprep.subr.mxu0 0.0
        %849 = vmatpush1.msra.mxu0 0.0
        %850 = vmatprep.subr.mxu0 0.0
        %851 = vmatpush1.msra.mxu0 0.0
        %852 = vmatprep.subr.mxu0 0.0
        %853 = vmatpush1.msra.mxu0 0.0
        %854 = vmatprep.subr.mxu0 0.0
        %855 = vmatpush1.msra.mxu0 0.0
        %856 = vmatprep.subr.mxu0 0.0
        %857 = vmatpush1.msra.mxu0 0.0
        %858 = vmatprep.subr.mxu0 0.0
        %859 = vmatpush1.msra.mxu0 0.0
        %860 = vmatprep.subr.mxu0 0.0
        %861 = vmatpush1.msra.mxu0 0.0
        %862 = vmatprep.subr.mxu0 0.0
        %863 = vmatpush1.msra.mxu0 0.0
        %864 = vmatprep.subr.mxu0 0.0
        %865 = vmatpush1.msra.mxu0 0.0
        %866 = vmatprep.subr.mxu0 0.0
        %867 = vmatpush1.msra.mxu0 0.0
        %868 = vmatprep.mubr.f32.mxu0 0.0
        %869 = vmatmul.mubr.f32.gmra.mrb[0].mxu0 %v461
        %v870 = vpop.f32.mrb[0].mxu0
        %v871 = vadd.f32 %v457, %v870
        %v872 = vpop.f32.mrb[0].mxu0
        %v873 = vadd.f32 %v457, %v872
        %874 = vdwg.mxu0
        %v879 = vcombine.low %v800, %v802
        %v880 = vcombine.low %v871, %v873
        %883 = vst [vmem:[%s236 + $0x10] sm:$0x77] %v879
        %884 = vst [vmem:[%s236 + $0x18] sm:$0x77] %v880
        %v885 = vld [vmem:[%s230 + $0x8] sm:$0xf]
        %v887 = vlaneseq
        %v888 = vshrl.u32 %v887, 7
        %v889 = vsub.s32 0, %v888
        %v890 = vrot.slane %v885, %v889
        %v891 = vlaneseq
        %v892 = vshrl.u32 %v891, 7
        %v893 = vsub.s32 1, %v892
        %v894 = vrot.slane %v885, %v893
        %v895 = vlaneseq
        %v896 = vshrl.u32 %v895, 7
        %v897 = vsub.s32 2, %v896
        %v898 = vrot.slane %v885, %v897
        %v899 = vlaneseq
        %v900 = vshrl.u32 %v899, 7
        %v901 = vsub.s32 3, %v900
        %v902 = vrot.slane %v885, %v901
        %v907 = vmul.f32 %v251, %v890
        %v908 = vmul.f32 %v251, %v894
        %v909 = vmul.f32 %v251, %v898
        %v910 = vmul.f32 %v251, %v902
        %v911 = vmul.f32 %v256, %v890
        %v912 = vmul.f32 %v256, %v894
        %v913 = vmul.f32 %v256, %v898
        %v914 = vmul.f32 %v256, %v902
        %v915 = vmul.f32 %v261, %v890
        %v916 = vmul.f32 %v261, %v894
        %v917 = vmul.f32 %v261, %v898
        %v918 = vmul.f32 %v261, %v902
        %v919 = vmul.f32 %v266, %v890
        %v920 = vmul.f32 %v266, %v894
        %v921 = vmul.f32 %v266, %v898
        %v922 = vmul.f32 %v266, %v902
        %v923 = vmul.f32 %v271, %v890
        %v924 = vmul.f32 %v271, %v894
        %v925 = vmul.f32 %v271, %v898
        %v926 = vmul.f32 %v271, %v902
        %v927 = vmul.f32 %v276, %v890
        %v928 = vmul.f32 %v276, %v894
        %v929 = vmul.f32 %v276, %v898
        %v930 = vmul.f32 %v276, %v902
        %v931 = vmul.f32 %v281, %v890
        %v932 = vmul.f32 %v281, %v894
        %v933 = vmul.f32 %v281, %v898
        %v934 = vmul.f32 %v281, %v902
        %v935 = vmul.f32 %v286, %v890
        %v936 = vmul.f32 %v286, %v894
        %v937 = vmul.f32 %v286, %v898
        %v938 = vmul.f32 %v286, %v902
        %v939 = vadd.f32 %v907, %v299
        %v940 = vadd.f32 %v908, %v299
        %v941 = vadd.f32 %v909, %v299
        %v942 = vadd.f32 %v910, %v299
        %v943 = vadd.f32 %v911, %v304
        %v944 = vadd.f32 %v912, %v304
        %v945 = vadd.f32 %v913, %v304
        %v946 = vadd.f32 %v914, %v304
        %v947 = vadd.f32 %v915, %v309
        %v948 = vadd.f32 %v916, %v309
        %v949 = vadd.f32 %v917, %v309
        %v950 = vadd.f32 %v918, %v309
        %v951 = vadd.f32 %v919, %v314
        %v952 = vadd.f32 %v920, %v314
        %v953 = vadd.f32 %v921, %v314
        %v954 = vadd.f32 %v922, %v314
        %v955 = vadd.f32 %v923, %v319
        %v956 = vadd.f32 %v924, %v319
        %v957 = vadd.f32 %v925, %v319
        %v958 = vadd.f32 %v926, %v319
        %v959 = vadd.f32 %v927, %v324
        %v960 = vadd.f32 %v928, %v324
        %v961 = vadd.f32 %v929, %v324
        %v962 = vadd.f32 %v930, %v324
        %v963 = vadd.f32 %v931, %v329
        %v964 = vadd.f32 %v932, %v329
        %v965 = vadd.f32 %v933, %v329
        %v966 = vadd.f32 %v934, %v329
        %v967 = vadd.f32 %v935, %v334
        %v968 = vadd.f32 %v936, %v334
        %v969 = vadd.f32 %v937, %v334
        %v970 = vadd.f32 %v938, %v334
        %v971 = vmax.f32 %v939, 0.0
        %v972 = vmax.f32 %v940, 0.0
        %v973 = vmax.f32 %v941, 0.0
        %v974 = vmax.f32 %v942, 0.0
        %v975 = vmax.f32 %v943, 0.0
        %v976 = vmax.f32 %v944, 0.0
        %v977 = vmax.f32 %v945, 0.0
        %v978 = vmax.f32 %v946, 0.0
        %v979 = vmax.f32 %v947, 0.0
        %v980 = vmax.f32 %v948, 0.0
        %v981 = vmax.f32 %v949, 0.0
        %v982 = vmax.f32 %v950, 0.0
        %v983 = vmax.f32 %v951, 0.0
        %v984 = vmax.f32 %v952, 0.0
        %v985 = vmax.f32 %v953, 0.0
        %v986 = vmax.f32 %v954, 0.0
        %v987 = vmax.f32 %v955, 0.0
        %v988 = vmax.f32 %v956, 0.0
        %v989 = vmax.f32 %v957, 0.0
        %v990 = vmax.f32 %v958, 0.0
        %v991 = vmax.f32 %v959, 0.0
        %v992 = vmax.f32 %v960, 0.0
        %v993 = vmax.f32 %v961, 0.0
        %v994 = vmax.f32 %v962, 0.0
        %v995 = vmax.f32 %v963, 0.0
        %v996 = vmax.f32 %v964, 0.0
        %v997 = vmax.f32 %v965, 0.0
        %v998 = vmax.f32 %v966, 0.0
        %v999 = vmax.f32 %v967, 0.0
        %v1000 = vmax.f32 %v968, 0.0
        %v1001 = vmax.f32 %v969, 0.0
        %v1002 = vmax.f32 %v970, 0.0
        %1003 = vmatprep.subr.mxu0 %v972
        %1004 = vmatpush1.msra.mxu0 %v971
        %1005 = vmatprep.subr.mxu0 %v976
        %1006 = vmatpush1.msra.mxu0 %v975
        %1007 = vmatprep.subr.mxu0 %v980
        %1008 = vmatpush1.msra.mxu0 %v979
        %1009 = vmatprep.subr.mxu0 %v984
        %1010 = vmatpush1.msra.mxu0 %v983
        %1011 = vmatprep.subr.mxu0 %v988
        %1012 = vmatpush1.msra.mxu0 %v987
        %1013 = vmatprep.subr.mxu0 %v992
        %1014 = vmatpush1.msra.mxu0 %v991
        %1015 = vmatprep.subr.mxu0 %v996
        %1016 = vmatpush1.msra.mxu0 %v995
        %1017 = vmatprep.subr.mxu0 %v1000
        %1018 = vmatpush1.msra.mxu0 %v999
        %1019 = vmatprep.subr.mxu0 0.0
        %1020 = vmatpush1.msra.mxu0 0.0
        %1021 = vmatprep.subr.mxu0 0.0
        %1022 = vmatpush1.msra.mxu0 0.0
        %1023 = vmatprep.subr.mxu0 0.0
        %1024 = vmatpush1.msra.mxu0 0.0
        %1025 = vmatprep.subr.mxu0 0.0
        %1026 = vmatpush1.msra.mxu0 0.0
        %1027 = vmatprep.subr.mxu0 0.0
        %1028 = vmatpush1.msra.mxu0 0.0
        %1029 = vmatprep.subr.mxu0 0.0
        %1030 = vmatpush1.msra.mxu0 0.0
        %1031 = vmatprep.subr.mxu0 0.0
        %1032 = vmatpush1.msra.mxu0 0.0
        %1033 = vmatprep.subr.mxu0 0.0
        %1034 = vmatpush1.msra.mxu0 0.0
        %1035 = vmatprep.subr.mxu0 0.0
        %1036 = vmatpush1.msra.mxu0 0.0
        %1037 = vmatprep.subr.mxu0 0.0
        %1038 = vmatpush1.msra.mxu0 0.0
        %1039 = vmatprep.subr.mxu0 0.0
        %1040 = vmatpush1.msra.mxu0 0.0
        %1041 = vmatprep.subr.mxu0 0.0
        %1042 = vmatpush1.msra.mxu0 0.0
        %1043 = vmatprep.subr.mxu0 0.0
        %1044 = vmatpush1.msra.mxu0 0.0
        %1045 = vmatprep.subr.mxu0 0.0
        %1046 = vmatpush1.msra.mxu0 0.0
        %1047 = vmatprep.subr.mxu0 0.0
        %1048 = vmatpush1.msra.mxu0 0.0
        %1049 = vmatprep.subr.mxu0 0.0
        %1050 = vmatpush1.msra.mxu0 0.0
        %1051 = vmatprep.subr.mxu0 0.0
        %1052 = vmatpush1.msra.mxu0 0.0
        %1053 = vmatprep.subr.mxu0 0.0
        %1054 = vmatpush1.msra.mxu0 0.0
        %1055 = vmatprep.subr.mxu0 0.0
        %1056 = vmatpush1.msra.mxu0 0.0
        %1057 = vmatprep.subr.mxu0 0.0
        %1058 = vmatpush1.msra.mxu0 0.0
        %1059 = vmatprep.subr.mxu0 0.0
        %1060 = vmatpush1.msra.mxu0 0.0
        %1061 = vmatprep.subr.mxu0 0.0
        %1062 = vmatpush1.msra.mxu0 0.0
        %1063 = vmatprep.subr.mxu0 0.0
        %1064 = vmatpush1.msra.mxu0 0.0
        %1065 = vmatprep.subr.mxu0 0.0
        %1066 = vmatpush1.msra.mxu0 0.0
        %1067 = vmatprep.mubr.f32.mxu0 0.0
        %1068 = vmatmul.mubr.f32.gmra.mrb[0].mxu0 %v461
        %v1069 = vpop.f32.mrb[0].mxu0
        %v1070 = vadd.f32 %v457, %v1069
        %v1071 = vpop.f32.mrb[0].mxu0
        %v1072 = vadd.f32 %v457, %v1071
        %1073 = vdwg.mxu0
        %1074 = vmatprep.subr.mxu0 %v974
        %1075 = vmatpush1.msra.mxu0 %v973
        %1076 = vmatprep.subr.mxu0 %v978
        %1077 = vmatpush1.msra.mxu0 %v977
        %1078 = vmatprep.subr.mxu0 %v982
        %1079 = vmatpush1.msra.mxu0 %v981
        %1080 = vmatprep.subr.mxu0 %v986
        %1081 = vmatpush1.msra.mxu0 %v985
        %1082 = vmatprep.subr.mxu0 %v990
        %1083 = vmatpush1.msra.mxu0 %v989
        %1084 = vmatprep.subr.mxu0 %v994
        %1085 = vmatpush1.msra.mxu0 %v993
        %1086 = vmatprep.subr.mxu0 %v998
        %1087 = vmatpush1.msra.mxu0 %v997
        %1088 = vmatprep.subr.mxu0 %v1002
        %1089 = vmatpush1.msra.mxu0 %v1001
        %1090 = vmatprep.subr.mxu0 0.0
        %1091 = vmatpush1.msra.mxu0 0.0
        %1092 = vmatprep.subr.mxu0 0.0
        %1093 = vmatpush1.msra.mxu0 0.0
        %1094 = vmatprep.subr.mxu0 0.0
        %1095 = vmatpush1.msra.mxu0 0.0
        %1096 = vmatprep.subr.mxu0 0.0
        %1097 = vmatpush1.msra.mxu0 0.0
        %1098 = vmatprep.subr.mxu0 0.0
        %1099 = vmatpush1.msra.mxu0 0.0
        %1100 = vmatprep.subr.mxu0 0.0
        %1101 = vmatpush1.msra.mxu0 0.0
        %1102 = vmatprep.subr.mxu0 0.0
        %1103 = vmatpush1.msra.mxu0 0.0
        %1104 = vmatprep.subr.mxu0 0.0
        %1105 = vmatpush1.msra.mxu0 0.0
        %1106 = vmatprep.subr.mxu0 0.0
        %1107 = vmatpush1.msra.mxu0 0.0
        %1108 = vmatprep.subr.mxu0 0.0
        %1109 = vmatpush1.msra.mxu0 0.0
        %1110 = vmatprep.subr.mxu0 0.0
        %1111 = vmatpush1.msra.mxu0 0.0
        %1112 = vmatprep.subr.mxu0 0.0
        %1113 = vmatpush1.msra.mxu0 0.0
        %1114 = vmatprep.subr.mxu0 0.0
        %1115 = vmatpush1.msra.mxu0 0.0
        %1116 = vmatprep.subr.mxu0 0.0
        %1117 = vmatpush1.msra.mxu0 0.0
        %1118 = vmatprep.subr.mxu0 0.0
        %1119 = vmatpush1.msra.mxu0 0.0
        %1120 = vmatprep.subr.mxu0 0.0
        %1121 = vmatpush1.msra.mxu0 0.0
        %1122 = vmatprep.subr.mxu0 0.0
        %1123 = vmatpush1.msra.mxu0 0.0
        %1124 = vmatprep.subr.mxu0 0.0
        %1125 = vmatpush1.msra.mxu0 0.0
        %1126 = vmatprep.subr.mxu0 0.0
        %1127 = vmatpush1.msra.mxu0 0.0
        %1128 = vmatprep.subr.mxu0 0.0
        %1129 = vmatpush1.msra.mxu0 0.0
        %1130 = vmatprep.subr.mxu0 0.0
        %1131 = vmatpush1.msra.mxu0 0.0
        %1132 = vmatprep.subr.mxu0 0.0
        %1133 = vmatpush1.msra.mxu0 0.0
        %1134 = vmatprep.subr.mxu0 0.0
        %1135 = vmatpush1.msra.mxu0 0.0
        %1136 = vmatprep.subr.mxu0 0.0
        %1137 = vmatpush1.msra.mxu0 0.0
        %1138 = vmatprep.mubr.f32.mxu0 0.0
        %1139 = vmatmul.mubr.f32.gmra.mrb[0].mxu0 %v461
        %v1140 = vpop.f32.mrb[0].mxu0
        %v1141 = vadd.f32 %v457, %v1140
        %v1142 = vpop.f32.mrb[0].mxu0
        %v1143 = vadd.f32 %v457, %v1142
        %1144 = vdwg.mxu0
        %v1149 = vcombine.low %v1070, %v1072
        %v1150 = vcombine.low %v1141, %v1143
        %1153 = vst [vmem:[%s236 + $0x20] sm:$0x77] %v1149
        %1154 = vst [vmem:[%s236 + $0x28] sm:$0x77] %v1150
        %v1155 = vld [vmem:[%s230 + $0xc] sm:$0xf]
        %v1157 = vlaneseq
        %v1158 = vshrl.u32 %v1157, 7
        %v1159 = vsub.s32 0, %v1158
        %v1160 = vrot.slane %v1155, %v1159
        %v1161 = vlaneseq
        %v1162 = vshrl.u32 %v1161, 7
        %v1163 = vsub.s32 1, %v1162
        %v1164 = vrot.slane %v1155, %v1163
        %v1165 = vlaneseq
        %v1166 = vshrl.u32 %v1165, 7
        %v1167 = vsub.s32 2, %v1166
        %v1168 = vrot.slane %v1155, %v1167
        %v1169 = vlaneseq
        %v1170 = vshrl.u32 %v1169, 7
        %v1171 = vsub.s32 3, %v1170
        %v1172 = vrot.slane %v1155, %v1171
        %v1177 = vmul.f32 %v251, %v1160
        %v1178 = vmul.f32 %v251, %v1164
        %v1179 = vmul.f32 %v251, %v1168
        %v1180 = vmul.f32 %v251, %v1172
        %v1181 = vmul.f32 %v256, %v1160
        %v1182 = vmul.f32 %v256, %v1164
        %v1183 = vmul.f32 %v256, %v1168
        %v1184 = vmul.f32 %v256, %v1172
        %v1185 = vmul.f32 %v261, %v1160
        %v1186 = vmul.f32 %v261, %v1164
        %v1187 = vmul.f32 %v261, %v1168
        %v1188 = vmul.f32 %v261, %v1172
        %v1189 = vmul.f32 %v266, %v1160
        %v1190 = vmul.f32 %v266, %v1164
        %v1191 = vmul.f32 %v266, %v1168
        %v1192 = vmul.f32 %v266, %v1172
        %v1193 = vmul.f32 %v271, %v1160
        %v1194 = vmul.f32 %v271, %v1164
        %v1195 = vmul.f32 %v271, %v1168
        %v1196 = vmul.f32 %v271, %v1172
        %v1197 = vmul.f32 %v276, %v1160
        %v1198 = vmul.f32 %v276, %v1164
        %v1199 = vmul.f32 %v276, %v1168
        %v1200 = vmul.f32 %v276, %v1172
        %v1201 = vmul.f32 %v281, %v1160
        %v1202 = vmul.f32 %v281, %v1164
        %v1203 = vmul.f32 %v281, %v1168
        %v1204 = vmul.f32 %v281, %v1172
        %v1205 = vmul.f32 %v286, %v1160
        %v1206 = vmul.f32 %v286, %v1164
        %v1207 = vmul.f32 %v286, %v1168
        %v1208 = vmul.f32 %v286, %v1172
        %v1209 = vadd.f32 %v1177, %v299
        %v1210 = vadd.f32 %v1178, %v299
        %v1211 = vadd.f32 %v1179, %v299
        %v1212 = vadd.f32 %v1180, %v299
        %v1213 = vadd.f32 %v1181, %v304
        %v1214 = vadd.f32 %v1182, %v304
        %v1215 = vadd.f32 %v1183, %v304
        %v1216 = vadd.f32 %v1184, %v304
        %v1217 = vadd.f32 %v1185, %v309
        %v1218 = vadd.f32 %v1186, %v309
        %v1219 = vadd.f32 %v1187, %v309
        %v1220 = vadd.f32 %v1188, %v309
        %v1221 = vadd.f32 %v1189, %v314
        %v1222 = vadd.f32 %v1190, %v314
        %v1223 = vadd.f32 %v1191, %v314
        %v1224 = vadd.f32 %v1192, %v314
        %v1225 = vadd.f32 %v1193, %v319
        %v1226 = vadd.f32 %v1194, %v319
        %v1227 = vadd.f32 %v1195, %v319
        %v1228 = vadd.f32 %v1196, %v319
        %v1229 = vadd.f32 %v1197, %v324
        %v1230 = vadd.f32 %v1198, %v324
        %v1231 = vadd.f32 %v1199, %v324
        %v1232 = vadd.f32 %v1200, %v324
        %v1233 = vadd.f32 %v1201, %v329
        %v1234 = vadd.f32 %v1202, %v329
        %v1235 = vadd.f32 %v1203, %v329
        %v1236 = vadd.f32 %v1204, %v329
        %v1237 = vadd.f32 %v1205, %v334
        %v1238 = vadd.f32 %v1206, %v334
        %v1239 = vadd.f32 %v1207, %v334
        %v1240 = vadd.f32 %v1208, %v334
        %v1241 = vmax.f32 %v1209, 0.0
        %v1242 = vmax.f32 %v1210, 0.0
        %v1243 = vmax.f32 %v1211, 0.0
        %v1244 = vmax.f32 %v1212, 0.0
        %v1245 = vmax.f32 %v1213, 0.0
        %v1246 = vmax.f32 %v1214, 0.0
        %v1247 = vmax.f32 %v1215, 0.0
        %v1248 = vmax.f32 %v1216, 0.0
        %v1249 = vmax.f32 %v1217, 0.0
        %v1250 = vmax.f32 %v1218, 0.0
        %v1251 = vmax.f32 %v1219, 0.0
        %v1252 = vmax.f32 %v1220, 0.0
        %v1253 = vmax.f32 %v1221, 0.0
        %v1254 = vmax.f32 %v1222, 0.0
        %v1255 = vmax.f32 %v1223, 0.0
        %v1256 = vmax.f32 %v1224, 0.0
        %v1257 = vmax.f32 %v1225, 0.0
        %v1258 = vmax.f32 %v1226, 0.0
        %v1259 = vmax.f32 %v1227, 0.0
        %v1260 = vmax.f32 %v1228, 0.0
        %v1261 = vmax.f32 %v1229, 0.0
        %v1262 = vmax.f32 %v1230, 0.0
        %v1263 = vmax.f32 %v1231, 0.0
        %v1264 = vmax.f32 %v1232, 0.0
        %v1265 = vmax.f32 %v1233, 0.0
        %v1266 = vmax.f32 %v1234, 0.0
        %v1267 = vmax.f32 %v1235, 0.0
        %v1268 = vmax.f32 %v1236, 0.0
        %v1269 = vmax.f32 %v1237, 0.0
        %v1270 = vmax.f32 %v1238, 0.0
        %v1271 = vmax.f32 %v1239, 0.0
        %v1272 = vmax.f32 %v1240, 0.0
        %1273 = vmatprep.subr.mxu0 %v1242
        %1274 = vmatpush1.msra.mxu0 %v1241
        %1275 = vmatprep.subr.mxu0 %v1246
        %1276 = vmatpush1.msra.mxu0 %v1245
        %1277 = vmatprep.subr.mxu0 %v1250
        %1278 = vmatpush1.msra.mxu0 %v1249
        %1279 = vmatprep.subr.mxu0 %v1254
        %1280 = vmatpush1.msra.mxu0 %v1253
        %1281 = vmatprep.subr.mxu0 %v1258
        %1282 = vmatpush1.msra.mxu0 %v1257
        %1283 = vmatprep.subr.mxu0 %v1262
        %1284 = vmatpush1.msra.mxu0 %v1261
        %1285 = vmatprep.subr.mxu0 %v1266
        %1286 = vmatpush1.msra.mxu0 %v1265
        %1287 = vmatprep.subr.mxu0 %v1270
        %1288 = vmatpush1.msra.mxu0 %v1269
        %1289 = vmatprep.subr.mxu0 0.0
        %1290 = vmatpush1.msra.mxu0 0.0
        %1291 = vmatprep.subr.mxu0 0.0
        %1292 = vmatpush1.msra.mxu0 0.0
        %1293 = vmatprep.subr.mxu0 0.0
        %1294 = vmatpush1.msra.mxu0 0.0
        %1295 = vmatprep.subr.mxu0 0.0
        %1296 = vmatpush1.msra.mxu0 0.0
        %1297 = vmatprep.subr.mxu0 0.0
        %1298 = vmatpush1.msra.mxu0 0.0
        %1299 = vmatprep.subr.mxu0 0.0
        %1300 = vmatpush1.msra.mxu0 0.0
        %1301 = vmatprep.subr.mxu0 0.0
        %1302 = vmatpush1.msra.mxu0 0.0
        %1303 = vmatprep.subr.mxu0 0.0
        %1304 = vmatpush1.msra.mxu0 0.0
        %1305 = vmatprep.subr.mxu0 0.0
        %1306 = vmatpush1.msra.mxu0 0.0
        %1307 = vmatprep.subr.mxu0 0.0
        %1308 = vmatpush1.msra.mxu0 0.0
        %1309 = vmatprep.subr.mxu0 0.0
        %1310 = vmatpush1.msra.mxu0 0.0
        %1311 = vmatprep.subr.mxu0 0.0
        %1312 = vmatpush1.msra.mxu0 0.0
        %1313 = vmatprep.subr.mxu0 0.0
        %1314 = vmatpush1.msra.mxu0 0.0
        %1315 = vmatprep.subr.mxu0 0.0
        %1316 = vmatpush1.msra.mxu0 0.0
        %1317 = vmatprep.subr.mxu0 0.0
        %1318 = vmatpush1.msra.mxu0 0.0
        %1319 = vmatprep.subr.mxu0 0.0
        %1320 = vmatpush1.msra.mxu0 0.0
        %1321 = vmatprep.subr.mxu0 0.0
        %1322 = vmatpush1.msra.mxu0 0.0
        %1323 = vmatprep.subr.mxu0 0.0
        %1324 = vmatpush1.msra.mxu0 0.0
        %1325 = vmatprep.subr.mxu0 0.0
        %1326 = vmatpush1.msra.mxu0 0.0
        %1327 = vmatprep.subr.mxu0 0.0
        %1328 = vmatpush1.msra.mxu0 0.0
        %1329 = vmatprep.subr.mxu0 0.0
        %1330 = vmatpush1.msra.mxu0 0.0
        %1331 = vmatprep.subr.mxu0 0.0
        %1332 = vmatpush1.msra.mxu0 0.0
        %1333 = vmatprep.subr.mxu0 0.0
        %1334 = vmatpush1.msra.mxu0 0.0
        %1335 = vmatprep.subr.mxu0 0.0
        %1336 = vmatpush1.msra.mxu0 0.0
        %1337 = vmatprep.mubr.f32.mxu0 0.0
        %1338 = vmatmul.mubr.f32.gmra.mrb[0].mxu0 %v461
        %v1339 = vpop.f32.mrb[0].mxu0
        %v1340 = vadd.f32 %v457, %v1339
        %v1341 = vpop.f32.mrb[0].mxu0
        %v1342 = vadd.f32 %v457, %v1341
        %1343 = vdwg.mxu0
        %1344 = vmatprep.subr.mxu0 %v1244
        %1345 = vmatpush1.msra.mxu0 %v1243
        %1346 = vmatprep.subr.mxu0 %v1248
        %1347 = vmatpush1.msra.mxu0 %v1247
        %1348 = vmatprep.subr.mxu0 %v1252
        %1349 = vmatpush1.msra.mxu0 %v1251
        %1350 = vmatprep.subr.mxu0 %v1256
        %1351 = vmatpush1.msra.mxu0 %v1255
        %1352 = vmatprep.subr.mxu0 %v1260
        %1353 = vmatpush1.msra.mxu0 %v1259
        %1354 = vmatprep.subr.mxu0 %v1264
        %1355 = vmatpush1.msra.mxu0 %v1263
        %1356 = vmatprep.subr.mxu0 %v1268
        %1357 = vmatpush1.msra.mxu0 %v1267
        %1358 = vmatprep.subr.mxu0 %v1272
        %1359 = vmatpush1.msra.mxu0 %v1271
        %1360 = vmatprep.subr.mxu0 0.0
        %1361 = vmatpush1.msra.mxu0 0.0
        %1362 = vmatprep.subr.mxu0 0.0
        %1363 = vmatpush1.msra.mxu0 0.0
        %1364 = vmatprep.subr.mxu0 0.0
        %1365 = vmatpush1.msra.mxu0 0.0
        %1366 = vmatprep.subr.mxu0 0.0
        %1367 = vmatpush1.msra.mxu0 0.0
        %1368 = vmatprep.subr.mxu0 0.0
        %1369 = vmatpush1.msra.mxu0 0.0
        %1370 = vmatprep.subr.mxu0 0.0
        %1371 = vmatpush1.msra.mxu0 0.0
        %1372 = vmatprep.subr.mxu0 0.0
        %1373 = vmatpush1.msra.mxu0 0.0
        %1374 = vmatprep.subr.mxu0 0.0
        %1375 = vmatpush1.msra.mxu0 0.0
        %1376 = vmatprep.subr.mxu0 0.0
        %1377 = vmatpush1.msra.mxu0 0.0
        %1378 = vmatprep.subr.mxu0 0.0
        %1379 = vmatpush1.msra.mxu0 0.0
        %1380 = vmatprep.subr.mxu0 0.0
        %1381 = vmatpush1.msra.mxu0 0.0
        %1382 = vmatprep.subr.mxu0 0.0
        %1383 = vmatpush1.msra.mxu0 0.0
        %1384 = vmatprep.subr.mxu0 0.0
        %1385 = vmatpush1.msra.mxu0 0.0
        %1386 = vmatprep.subr.mxu0 0.0
        %1387 = vmatpush1.msra.mxu0 0.0
        %1388 = vmatprep.subr.mxu0 0.0
        %1389 = vmatpush1.msra.mxu0 0.0
        %1390 = vmatprep.subr.mxu0 0.0
        %1391 = vmatpush1.msra.mxu0 0.0
        %1392 = vmatprep.subr.mxu0 0.0
        %1393 = vmatpush1.msra.mxu0 0.0
        %1394 = vmatprep.subr.mxu0 0.0
        %1395 = vmatpush1.msra.mxu0 0.0
        %1396 = vmatprep.subr.mxu0 0.0
        %1397 = vmatpush1.msra.mxu0 0.0
        %1398 = vmatprep.subr.mxu0 0.0
        %1399 = vmatpush1.msra.mxu0 0.0
        %1400 = vmatprep.subr.mxu0 0.0
        %1401 = vmatpush1.msra.mxu0 0.0
        %1402 = vmatprep.subr.mxu0 0.0
        %1403 = vmatpush1.msra.mxu0 0.0
        %1404 = vmatprep.subr.mxu0 0.0
        %1405 = vmatpush1.msra.mxu0 0.0
        %1406 = vmatprep.subr.mxu0 0.0
        %1407 = vmatpush1.msra.mxu0 0.0
        %1408 = vmatprep.mubr.f32.mxu0 0.0
        %1409 = vmatmul.mubr.f32.gmra.mrb[0].mxu0 %v461
        %v1410 = vpop.f32.mrb[0].mxu0
        %v1411 = vadd.f32 %v457, %v1410
        %v1412 = vpop.f32.mrb[0].mxu0
        %v1413 = vadd.f32 %v457, %v1412
        %1414 = vdwg.mxu0
        %v1419 = vcombine.low %v1340, %v1342
        %v1420 = vcombine.low %v1411, %v1413
        %1423 = vst [vmem:[%s236 + $0x30] sm:$0x77] %v1419
        %1424 = vst [vmem:[%s236 + $0x38] sm:$0x77] %v1420
        %s1425 = smul.u32 16, %s17
        %p1426 = scmp.lt.s32.totalorder %s1425, 31
        %s1427 = scalar_select %p1426, %s1425, 31
        %s1428 = smul.addr %s1427, 4
        %s1429 = scalar_lea.vmem %s5, %s1428
        // Predicated region
        $region45: #{position_encoder_forward.1} parent=39 // pred_check
          %p1430 = pneg %p145
        $region46: #{position_encoder_forward.1} parent=39 // pred_check_branch
          %1432 = sbr.rel (%p1430) target = $region48
        $region47: #{position_encoder_forward.1} parent=39 // pred_region
          %s1433 = smul.u32 16, %s17
        $region48: #{position_encoder_forward.1} parent=39 // pred_fallthru
          _
      $region40: #{position_encoder_forward.1} parent=5 // pred_fallthru
        _
      %p1434 = scmp.le.s32.totalorder 2, %s12
      // Predicated region
      $region49: #{position_encoder_forward.1} parent=5 // pred_check
        %p1435 = pneg %p1434
      $region50: #{position_encoder_forward.1} parent=5 // pred_check_branch
        %1437 = sbr.rel (%p1435) target = $region52
      $region51: #{position_encoder_forward.1} parent=5 // pred_region
        %s1438 = ssub.s32 %s12, 2
        // Predicated region
        $region53: #{position_encoder_forward.1} parent=51 // pred_check
          %p1439 = pneg %p151
        $region54: #{position_encoder_forward.1} parent=51 // pred_check_branch
          %1441 = sbr.rel (%p1439) target = $region56
        $region55: #{position_encoder_forward.1} parent=51 // pred_region
          %s1442 = smul.u32 16, %s18
          %p1443 = scmp.lt.s32.totalorder %s1442, 31
          %s1444 = scalar_select %p1443, %s1442, 31
          %s1445 = smul.addr %s1444, 4
          %s1446 = scalar_lea.vmem %s5, %s1445
        $region56: #{position_encoder_forward.1} parent=51 // pred_fallthru
          _
      $region52: #{position_encoder_forward.1} parent=5 // pred_fallthru
        _
    $region6: #{position_encoder_forward.1} parent=1 // loop_footer
      %s16 = sadd.s32 1, %s12
    $region7: #{position_encoder_forward.1} parent=1 // loop_footer_branch
      %11 = sbr.rel target = $region3
    $region8: #{position_encoder_forward.1} parent=1 // loop_exit
      _
    %1447 = vsyncpa [#allocation3], 1
    %s1448 = scalar_lea.sflag [#allocation3], 1
    %1449 = vsyncpa %s1448, 1

</llo_original>
